<compile_context>
chip_gen: v7x
topology: tpu7x:2x2x1
jax: 0.10.0
libtpu: 0.0.40
codegen_flags: <defaults>
</compile_context>

<pallas_src>
import math
import functools

import jax
import jax.numpy as jnp
from jax import lax
from jax.experimental import pallas as pl
from jax.experimental.pallas import tpu as pltpu


# ---------------------------------------------------------------------------
# Kernel 1: LayerNorm 1 + fused QKV projection (heads split only at the store)
# ---------------------------------------------------------------------------
def _ln_qkv_kernel(x_ref, ln1w_ref, ln1b_ref, wqkv_ref, bqkv_ref,
                   q_ref, kt_ref, v_ref, *, n_head, scale):
    x = x_ref[0].astype(jnp.float32)                          # (tq, C)
    mu = jnp.mean(x, axis=-1, keepdims=True)
    var = jnp.mean(jnp.square(x - mu), axis=-1, keepdims=True)
    h = (x - mu) * lax.rsqrt(var + 1e-5)
    h = h * ln1w_ref[...] + ln1b_ref[...]                     # fp32 LN

    tq, C = h.shape
    H = n_head
    D = C // H

    # Single fused matmul: (tq, C) @ (C, 3C), bf16 operands, fp32 accumulation.
    qkv = jnp.dot(h.astype(wqkv_ref.dtype), wqkv_ref[...],
                  preferred_element_type=jnp.float32) + bqkv_ref[...]   # (tq, 3C)

    q = qkv[:, 0 * C:1 * C] * scale                           # pre-scale by 1/sqrt(D)
    k = qkv[:, 1 * C:2 * C]
    v = qkv[:, 2 * C:3 * C]

    # Split heads at store time: (tq, C) -> (H, tq, D); K -> (H, D, tq) (transposed
    # once here so kernel 2 never transposes it and its T axis stays lane-dense).
    q_ref[0] = q.reshape(tq, H, D).transpose(1, 0, 2).astype(q_ref.dtype)
    kt_ref[0] = k.transpose(1, 0).reshape(H, D, tq).astype(kt_ref.dtype)
    v_ref[0] = v.reshape(tq, H, D).transpose(1, 0, 2).astype(v_ref.dtype)


# ---------------------------------------------------------------------------
# Kernel 2: flash attention (triangular grid) + fused out-proj + LN2 + MLP
# ---------------------------------------------------------------------------
def _attn_mlp_kernel(qi_tab_ref, ki_tab_ref,
                     q_ref, kt_ref, v_ref, x_ref,
                     wproj_ref, bproj_ref, ln2w_ref, ln2b_ref,
                     wfc_ref, bfc_ref, wfc2_ref, bfc2_ref,
                     o_ref,
                     m_sc, l_sc, acc_sc, *, tq, tk):
    t = pl.program_id(1)
    qi = qi_tab_ref[t]
    ki = ki_tab_ref[t]

    @pl.when(ki == 0)
    def _init():
        m_sc[...] = jnp.full(m_sc.shape, -jnp.inf, jnp.float32)
        l_sc[...] = jnp.zeros(l_sc.shape, jnp.float32)
        acc_sc[...] = jnp.zeros(acc_sc.shape, jnp.float32)

    def _softmax_step(apply_mask):
        q = q_ref[0]                                           # (H, tq, D) bf16, pre-scaled
        kt = kt_ref[0]                                         # (H, D, tk) bf16
        s = jnp.einsum('hqd,hdk->hqk', q, kt,
                       preferred_element_type=jnp.float32)     # (H, tq, tk) fp32
        if apply_mask:
            # Only reached on the diagonal tile (qi == ki, tq == tk), so the
            # global row/col offsets cancel and a local lower-triangle suffices.
            row = lax.broadcasted_iota(jnp.int32, (tq, tk), 0)
            col = lax.broadcasted_iota(jnp.int32, (tq, tk), 1)
            s = jnp.where((row >= col)[None, :, :], s, -1e30)

        m_prev = m_sc[...]
        m_new = jnp.maximum(m_prev, s.max(axis=-1, keepdims=True))
        alpha = jnp.exp(m_prev - m_new)
        p = jnp.exp(s - m_new)
        l_sc[...] = alpha * l_sc[...] + p.sum(axis=-1, keepdims=True)
        acc_sc[...] = alpha * acc_sc[...] + jnp.einsum(
            'hqk,hkd->hqd', p.astype(v_ref.dtype), v_ref[0],
            preferred_element_type=jnp.float32)
        m_sc[...] = m_new

    # Off-diagonal tiles: fully unmasked (no iota / select work).
    @pl.when(ki < qi)
    def _off_diagonal():
        _softmax_step(apply_mask=False)

    # Diagonal tile: masked step, then finalize (last step for this Q tile).
    @pl.when(ki == qi)
    def _diagonal_and_finalize():
        _softmax_step(apply_mask=True)

        x_res = x_ref[0].astype(jnp.float32)                   # (tq, C)
        inv_l = pl.reciprocal(l_sc[...], approx=True)          # EUP slot
        out_h = acc_sc[...] * inv_l                            # (H, tq, D) fp32
        H, _, D = out_h.shape
        # Head-fused output projection: one transpose -> (tq, C), one (tq,C)@(C,C).
        y = out_h.transpose(1, 0, 2).reshape(tq, H * D).astype(wproj_ref.dtype)
        x_res = x_res + jnp.dot(y, wproj_ref[...],
                                preferred_element_type=jnp.float32) + bproj_ref[...]

        mu = jnp.mean(x_res, axis=-1, keepdims=True)
        var = jnp.mean(jnp.square(x_res - mu), axis=-1, keepdims=True)
        h2 = (x_res - mu) * lax.rsqrt(var + 1e-5)
        h2 = h2 * ln2w_ref[...] + ln2b_ref[...]

        f = jnp.dot(h2.astype(wfc_ref.dtype), wfc_ref[...],
                    preferred_element_type=jnp.float32) + bfc_ref[...]
        # exact (erf-based) GELU, matching torch.nn.GELU() default
        f = 0.5 * f * (1.0 + lax.erf(f * (1.0 / math.sqrt(2.0))))
        f = jnp.dot(f.astype(wfc2_ref.dtype), wfc2_ref[...],
                    preferred_element_type=jnp.float32) + bfc2_ref[...]

        o_ref[0] = (x_res + f).astype(o_ref.dtype)             # residual 2


# ---------------------------------------------------------------------------
# Host-side wrapper
# ---------------------------------------------------------------------------
def _tpu_vmem_capacity():
    try:
        return int(pltpu.get_tpu_info().vmem_capacity_bytes)
    except Exception:
        return 64 * 1024 * 1024          # conservative: v7x per-TensorCore VMEM


def _pick_seq_tile(T, vmem_cap):
    # Larger activation tiles on 128-MiB parts (v5e/v6e), smaller on 64-MiB v7x
    # (bounds the live (H, tq, tk) fp32 score/prob intermediates as well).
    target = 512 if vmem_cap >= (100 << 20) else 256
    if T <= target:
        return T
    for t in (512, 256, 128, 64, 32, 16, 8):
        if t <= target and T % t == 0:
            return t
    # Fallback: whole sequence as one tile (may exceed VMEM for awkward large T;
    # pad T to a multiple of 128 upstream in that case).
    return T


def _const_spec(shape, index_map, single_buffer):
    """Whole-array operand whose block index never changes.

    Single-buffered (pl.Buffered(1)) when supported: the default double buffer
    buys nothing for a constant block index and, for the MLP weights, doubles
    their VMEM footprint (breaks the v7x 64-MiB budget at larger C).
    """
    if single_buffer:
        try:
            return pl.BlockSpec(shape, index_map, pipeline_mode=pl.Buffered(1))
        except TypeError:
            pass
    return pl.BlockSpec(shape, index_map)


def block_forward(x, params, n_head, compute_dtype=jnp.bfloat16,
                  single_buffer_weights=True):
    (ln1w, ln1b, w_attn, b_attn, w_proj, b_proj,
     ln2w, ln2b, w_fc, b_fc, w_fc2, b_fc2) = params
    B, T, C = x.shape
    H = n_head
    assert C % H == 0, "n_embd must be divisible by n_head"
    D = C // H

    # MXU operands in bf16; biases / LN params stay fp32.
    w_qkv = w_attn.astype(compute_dtype)        # (C, 3C)
    b_qkv = b_attn.astype(jnp.float32)          # (1, 3C)
    w_prj = w_proj.astype(compute_dtype)        # (C, C)
    w_f1 = w_fc.astype(compute_dtype)           # (C, 4C)
    w_f2 = w_fc2.astype(compute_dtype)          # (4C, C)

    vmem_cap = _tpu_vmem_capacity()
    vmem_limit = int(vmem_cap * 0.75)
    tq = _pick_seq_tile(T, vmem_cap)
    tk = tq
    assert T % tq == 0
    nq = T // tq

    # -------------------- Kernel 1: LN1 + fused QKV projection --------------
    def k1_const(shape):
        return _const_spec(shape, lambda b, qi: (0,) * len(shape),
                           single_buffer_weights)

    q, kt, v = pl.pallas_call(
        functools.partial(_ln_qkv_kernel, n_head=H, scale=1.0 / math.sqrt(D)),
        out_shape=(jax.ShapeDtypeStruct((B, H, T, D), compute_dtype),
                   jax.ShapeDtypeStruct((B, H, D, T), compute_dtype),   # K transposed
                   jax.ShapeDtypeStruct((B, H, T, D), compute_dtype)),
        grid_spec=pltpu.PrefetchScalarGridSpec(
            num_scalar_prefetch=0,
            grid=(B, nq),
            in_specs=[
                pl.BlockSpec((1, tq, C), lambda b, qi: (b, qi, 0)),
                k1_const((1, C)), k1_const((1, C)),
                k1_const((C, 3 * C)), k1_const((1, 3 * C)),
            ],
            out_specs=[
                pl.BlockSpec((1, H, tq, D), lambda b, qi: (b, 0, qi, 0)),
                pl.BlockSpec((1, H, D, tq), lambda b, qi: (b, 0, 0, qi)),
                pl.BlockSpec((1, H, tq, D), lambda b, qi: (b, 0, qi, 0)),
            ],
        ),
        compiler_params=pltpu.CompilerParams(
            dimension_semantics=("parallel", "parallel"),
            vmem_limit_bytes=vmem_limit),
    )(x, ln1w, ln1b, w_qkv, b_qkv)

    # ------ Kernel 2: flash attention + proj + LN2 + MLP + residuals --------
    # Lower-triangular (qi, ki) step table (scalar-prefetched into SMEM): only
    # causally-valid tiles are ever scheduled; finalize happens at ki == qi.
    qi_idx, ki_idx = [], []
    for q_i in range(nq):
        for k_i in range(q_i + 1):
            qi_idx.append(q_i)
            ki_idx.append(k_i)
    qi_tab = jnp.asarray(qi_idx, jnp.int32)
    ki_tab = jnp.asarray(ki_idx, jnp.int32)
    n_steps = len(qi_idx)

    def k2_const(shape):
        return _const_spec(shape, lambda b, t, qt, kt_: (0,) * len(shape),
                           single_buffer_weights)

    out = pl.pallas_call(
        functools.partial(_attn_mlp_kernel, tq=tq, tk=tk),
        out_shape=jax.ShapeDtypeStruct((B, T, C), x.dtype),
        grid_spec=pltpu.PrefetchScalarGridSpec(
            num_scalar_prefetch=2,
            grid=(B, n_steps),
            in_specs=[
                pl.BlockSpec((1, H, tq, D), lambda b, t, qt, kt_: (b, 0, qt[t], 0)),
                pl.BlockSpec((1, H, D, tk), lambda b, t, qt, kt_: (b, 0, 0, kt_[t])),
                pl.BlockSpec((1, H, tk, D), lambda b, t, qt, kt_: (b, 0, kt_[t], 0)),
                pl.BlockSpec((1, tq, C), lambda b, t, qt, kt_: (b, qt[t], 0)),
                k2_const((C, C)), k2_const((1, C)),            # attn proj W, b
                k2_const((1, C)), k2_const((1, C)),            # ln2 w, b
                k2_const((C, 4 * C)), k2_const((1, 4 * C)),    # mlp fc W, b
                k2_const((4 * C, C)), k2_const((1, C)),        # mlp proj W, b
            ],
            out_specs=pl.BlockSpec((1, tq, C), lambda b, t, qt, kt_: (b, qt[t], 0)),
            scratch_shapes=[
                pltpu.VMEM((H, tq, 1), jnp.float32),           # running max
                pltpu.VMEM((H, tq, 1), jnp.float32),           # running denom
                pltpu.VMEM((H, tq, D), jnp.float32),           # running output acc
            ],
        ),
        compiler_params=pltpu.CompilerParams(
            dimension_semantics=("parallel", "arbitrary"),
            vmem_limit_bytes=vmem_limit),
    )(qi_tab, ki_tab, q, kt, v, x, w_prj, b_proj, ln2w, ln2b,
      w_f1, b_fc, w_f2, b_fc2)
    return out


# ---------------------------------------------------------------------------
# Parameters (Linear weights stored as (in, out), i.e. PyTorch W.T)
# ---------------------------------------------------------------------------
def init_params(key, n_embd):
    C = n_embd
    ks = jax.random.split(key, 4)
    std = 0.02
    w_attn = jax.random.normal(ks[0], (C, 3 * C), jnp.float32) * std
    b_attn = jnp.zeros((1, 3 * C), jnp.float32)
    w_proj = jax.random.normal(ks[1], (C, C), jnp.float32) * std
    b_proj = jnp.zeros((1, C), jnp.float32)
    w_fc = jax.random.normal(ks[2], (C, 4 * C), jnp.float32) * std
    b_fc = jnp.zeros((1, 4 * C), jnp.float32)
    w_fc2 = jax.random.normal(ks[3], (4 * C, C), jnp.float32) * std
    b_fc2 = jnp.zeros((1, C), jnp.float32)
    ln1_w = jnp.ones((1, C), jnp.float32)
    ln1_b = jnp.zeros((1, C), jnp.float32)
    ln2_w = jnp.ones((1, C), jnp.float32)
    ln2_b = jnp.zeros((1, C), jnp.float32)
    return (ln1_w, ln1_b, w_attn, b_attn, w_proj, b_proj,
            ln2_w, ln2_b, w_fc, b_fc, w_fc2, b_fc2)


# Pure-JAX fp32 reference (mirrors the PyTorch Block forward).
def reference_block(x, params, n_head):
    (ln1w, ln1b, w_attn, b_attn, w_proj, b_proj,
     ln2w, ln2b, w_fc, b_fc, w_fc2, b_fc2) = params
    B, T, C = x.shape
    H = n_head
    D = C // H

    def ln(z, w, b):
        mu = jnp.mean(z, axis=-1, keepdims=True)
        var = jnp.mean(jnp.square(z - mu), axis=-1, keepdims=True)
        return (z - mu) / jnp.sqrt(var + 1e-5) * w + b

    h = ln(x, ln1w, ln1b)
    qkv = h @ w_attn + b_attn
    q, k, v = qkv[..., :C], qkv[..., C:2 * C], qkv[..., 2 * C:]

    def heads(z):
        return z.reshape(B, T, H, D).transpose(0, 2, 1, 3)

    q, k, v = heads(q), heads(k), heads(v)
    att = jnp.einsum('bhqd,bhkd->bhqk', q, k) / math.sqrt(D)
    mask = jnp.tril(jnp.ones((T, T), bool))
    att = jnp.where(mask, att, -jnp.inf)
    att = jax.nn.softmax(att, axis=-1)
    y = jnp.einsum('bhqk,bhkd->bhqd', att, v)
    y = y.transpose(0, 2, 1, 3).reshape(B, T, C)
    x = x + (y @ w_proj + b_proj)

    h2 = ln(x, ln2w, ln2b)
    f = h2 @ w_fc + b_fc
    f = 0.5 * f * (1.0 + lax.erf(f * (1.0 / math.sqrt(2.0))))
    f = f @ w_fc2 + b_fc2
    return x + f


if __name__ == "__main__":
    # config: n_embd=32, n_head=4, bias=True, dropout=0.0, block_size>=T
    B, T, C, n_head = 2, 8, 32, 4

    key = jax.random.PRNGKey(0)
    kx, kp = jax.random.split(key)
    x = jax.random.normal(kx, (B, T, C), jnp.float32)
    params = init_params(kp, C)

    try:
        out = jax.block_until_ready(
            block_forward(x, params, n_head, single_buffer_weights=True))
    except Exception:
        # Older jax releases may reject pl.Buffered(1); fall back to the
        # default double-buffered weight pipeline (identical semantics).
        out = jax.block_until_ready(
            block_forward(x, params, n_head, single_buffer_weights=False))

    assert out.shape == (B, T, C)
    assert bool(jnp.all(jnp.isfinite(out)))

    ref = reference_block(x, params, n_head)
    max_err = float(jnp.max(jnp.abs(out - ref)))
    assert max_err < 5e-2, f"max abs error vs fp32 reference: {max_err}"
    print("KERNEL_OK")
</pallas_src>

<mosaic_0001>
module attributes {stable_mosaic.version = 11 : i64} {
  func.func @_ln_qkv_kernel(%arg0: i32, %arg1: i32, %arg2: memref<1x8x32xf32, #tpu.memory_space<vmem>>, %arg3: memref<1x32xf32, #tpu.memory_space<vmem>>, %arg4: memref<1x32xf32, #tpu.memory_space<vmem>>, %arg5: memref<32x96xbf16, #tpu.memory_space<vmem>>, %arg6: memref<1x96xf32, #tpu.memory_space<vmem>>, %arg7: memref<1x4x8x8xbf16, #tpu.memory_space<vmem>>, %arg8: memref<1x4x8x8xbf16, #tpu.memory_space<vmem>>, %arg9: memref<1x4x8x8xbf16, #tpu.memory_space<vmem>>) attributes {dimension_semantics = [#tpu.dimension_semantics<parallel>, #tpu.dimension_semantics<parallel>], iteration_bounds = array<i64: 2, 1>, scalar_prefetch = 0 : i64, scratch_operands = 0 : i64, tpu.core_type = #tpu.core_type<tc>, window_params = [{transform_indices = @transform_0, window_bounds = array<i64: 1, 8, 32>}, {pipeline_mode = #tpu.pipeline_mode<synchronous>, transform_indices = @transform_1, window_bounds = array<i64: 1, 32>}, {pipeline_mode = #tpu.pipeline_mode<synchronous>, transform_indices = @transform_2, window_bounds = array<i64: 1, 32>}, {pipeline_mode = #tpu.pipeline_mode<synchronous>, transform_indices = @transform_3, window_bounds = array<i64: 32, 96>}, {pipeline_mode = #tpu.pipeline_mode<synchronous>, transform_indices = @transform_4, window_bounds = array<i64: 1, 96>}, {transform_indices = @transform_5, window_bounds = array<i64: 1, 4, 8, 8>}, {transform_indices = @transform_6, window_bounds = array<i64: 1, 4, 8, 8>}, {transform_indices = @transform_7, window_bounds = array<i64: 1, 4, 8, 8>}]} {
    %c0 = arith.constant 0 : index
    %c0_0 = arith.constant 0 : index
    %c0_1 = arith.constant 0 : index
    %0 = vector.load %arg2[%c0, %c0_0, %c0_1] : memref<1x8x32xf32, #tpu.memory_space<vmem>>, vector<1x8x32xf32>
    %1 = vector.shape_cast %0 : vector<1x8x32xf32> to vector<8x32xf32>
    %cst = arith.constant dense<0.000000e+00> : vector<8xf32>
    %2 = vector.multi_reduction <add>, %1, %cst [1] : vector<8x32xf32> to vector<8xf32>
    %3 = vector.shape_cast %2 : vector<8xf32> to vector<8x1xf32>
    %cst_2 = arith.constant 3.200000e+01 : f32
    %4 = vector.broadcast %cst_2 : f32 to vector<8x1xf32>
    %5 = arith.divf %3, %4 : vector<8x1xf32>
    %6 = vector.broadcast %5 : vector<8x1xf32> to vector<8x32xf32>
    %7 = arith.subf %1, %6 : vector<8x32xf32>
    %8 = arith.mulf %7, %7 : vector<8x32xf32>
    %cst_3 = arith.constant dense<0.000000e+00> : vector<8xf32>
    %9 = vector.multi_reduction <add>, %8, %cst_3 [1] : vector<8x32xf32> to vector<8xf32>
    %10 = vector.shape_cast %9 : vector<8xf32> to vector<8x1xf32>
    %cst_4 = arith.constant 3.200000e+01 : f32
    %11 = vector.broadcast %cst_4 : f32 to vector<8x1xf32>
    %12 = arith.divf %10, %11 : vector<8x1xf32>
    %13 = vector.broadcast %5 : vector<8x1xf32> to vector<8x32xf32>
    %14 = arith.subf %1, %13 : vector<8x32xf32>
    %cst_5 = arith.constant 9.99999974E-6 : f32
    %15 = vector.broadcast %cst_5 : f32 to vector<8x1xf32>
    %16 = arith.addf %12, %15 : vector<8x1xf32>
    %17 = math.rsqrt %16 : vector<8x1xf32>
    %18 = vector.broadcast %17 : vector<8x1xf32> to vector<8x32xf32>
    %19 = arith.mulf %14, %18 : vector<8x32xf32>
    %c0_6 = arith.constant 0 : index
    %c0_7 = arith.constant 0 : index
    %20 = vector.load %arg3[%c0_6, %c0_7] : memref<1x32xf32, #tpu.memory_space<vmem>>, vector<1x32xf32>
    %21 = vector.broadcast %20 : vector<1x32xf32> to vector<8x32xf32>
    %22 = arith.mulf %19, %21 : vector<8x32xf32>
    %c0_8 = arith.constant 0 : index
    %c0_9 = arith.constant 0 : index
    %23 = vector.load %arg4[%c0_8, %c0_9] : memref<1x32xf32, #tpu.memory_space<vmem>>, vector<1x32xf32>
    %24 = vector.broadcast %23 : vector<1x32xf32> to vector<8x32xf32>
    %25 = arith.addf %22, %24 : vector<8x32xf32>
    %26 = arith.truncf %25 : vector<8x32xf32> to vector<8x32xbf16>
    %c0_10 = arith.constant 0 : index
    %c0_11 = arith.constant 0 : index
    %27 = vector.load %arg5[%c0_10, %c0_11] : memref<32x96xbf16, #tpu.memory_space<vmem>>, vector<32x96xbf16>
    %cst_12 = arith.constant dense<0.000000e+00> : vector<8x96xf32>
    %28 = tpu.matmul %26, %27, %cst_12 {dimension_numbers = #tpu.dot_dimension_numbers<[1], [0], [0], [1], [0, 0, 1, 1], [], []>} : vector<8x32xbf16>, vector<32x96xbf16>, vector<8x96xf32> -> vector<8x96xf32>
    %c0_13 = arith.constant 0 : index
    %c0_14 = arith.constant 0 : index
    %29 = vector.load %arg6[%c0_13, %c0_14] : memref<1x96xf32, #tpu.memory_space<vmem>>, vector<1x96xf32>
    %30 = vector.broadcast %29 : vector<1x96xf32> to vector<8x96xf32>
    %31 = arith.addf %28, %30 : vector<8x96xf32>
    %32 = vector.extract_strided_slice %31 {offsets = [0, 0], sizes = [8, 32], strides = [1, 1]} : vector<8x96xf32> to vector<8x32xf32>
    %cst_15 = arith.constant 0.353553385 : f32
    %33 = vector.broadcast %cst_15 : f32 to vector<8x32xf32>
    %34 = arith.mulf %32, %33 : vector<8x32xf32>
    %35 = vector.extract_strided_slice %31 {offsets = [0, 32], sizes = [8, 32], strides = [1, 1]} : vector<8x96xf32> to vector<8x32xf32>
    %36 = vector.extract_strided_slice %31 {offsets = [0, 64], sizes = [8, 32], strides = [1, 1]} : vector<8x96xf32> to vector<8x32xf32>
    %37 = vector.shape_cast %34 : vector<8x32xf32> to vector<8x4x8xf32>
    %38 = tpu.transpose %37, [1, 0, 2] : vector<8x4x8xf32> -> vector<4x8x8xf32>
    %39 = arith.truncf %38 : vector<4x8x8xf32> to vector<4x8x8xbf16>
    %c0_16 = arith.constant 0 : index
    %c0_17 = arith.constant 0 : index
    %c0_18 = arith.constant 0 : index
    %c0_19 = arith.constant 0 : index
    %40 = vector.load %arg7[%c0_16, %c0_17, %c0_18, %c0_19] : memref<1x4x8x8xbf16, #tpu.memory_space<vmem>>, vector<1x4x8x8xbf16>
    %41 = vector.shape_cast %40 : vector<1x4x8x8xbf16> to vector<4x8x8xbf16>
    %42 = vector.shape_cast %39 : vector<4x8x8xbf16> to vector<1x4x8x8xbf16>
    tpu.vector_store %arg7[%c0_16, %c0_17, %c0_18, %c0_19], %42 {strides = array<i32>} : memref<1x4x8x8xbf16, #tpu.memory_space<vmem>>, vector<1x4x8x8xbf16>,
    %43 = tpu.transpose %35, [1, 0] : vector<8x32xf32> -> vector<32x8xf32>
    %44 = vector.shape_cast %43 : vector<32x8xf32> to vector<4x8x8xf32>
    %45 = arith.truncf %44 : vector<4x8x8xf32> to vector<4x8x8xbf16>
    %c0_20 = arith.constant 0 : index
    %c0_21 = arith.constant 0 : index
    %c0_22 = arith.constant 0 : index
    %c0_23 = arith.constant 0 : index
    %46 = vector.load %arg8[%c0_20, %c0_21, %c0_22, %c0_23] : memref<1x4x8x8xbf16, #tpu.memory_space<vmem>>, vector<1x4x8x8xbf16>
    %47 = vector.shape_cast %46 : vector<1x4x8x8xbf16> to vector<4x8x8xbf16>
    %48 = vector.shape_cast %45 : vector<4x8x8xbf16> to vector<1x4x8x8xbf16>
    tpu.vector_store %arg8[%c0_20, %c0_21, %c0_22, %c0_23], %48 {strides = array<i32>} : memref<1x4x8x8xbf16, #tpu.memory_space<vmem>>, vector<1x4x8x8xbf16>,
    %49 = vector.shape_cast %36 : vector<8x32xf32> to vector<8x4x8xf32>
    %50 = tpu.transpose %49, [1, 0, 2] : vector<8x4x8xf32> -> vector<4x8x8xf32>
    %51 = arith.truncf %50 : vector<4x8x8xf32> to vector<4x8x8xbf16>
    %c0_24 = arith.constant 0 : index
    %c0_25 = arith.constant 0 : index
    %c0_26 = arith.constant 0 : index
    %c0_27 = arith.constant 0 : index
    %52 = vector.load %arg9[%c0_24, %c0_25, %c0_26, %c0_27] : memref<1x4x8x8xbf16, #tpu.memory_space<vmem>>, vector<1x4x8x8xbf16>
    %53 = vector.shape_cast %52 : vector<1x4x8x8xbf16> to vector<4x8x8xbf16>
    %54 = vector.shape_cast %51 : vector<4x8x8xbf16> to vector<1x4x8x8xbf16>
    tpu.vector_store %arg9[%c0_24, %c0_25, %c0_26, %c0_27], %54 {strides = array<i32>} : memref<1x4x8x8xbf16, #tpu.memory_space<vmem>>, vector<1x4x8x8xbf16>,
    return
  }
  func.func @transform_0(%arg0: i32, %arg1: i32) -> (i32, i32, i32) {
    %c0_i32 = arith.constant 0 : i32
    %c0_i32_0 = arith.constant 0 : i32
    return %arg0, %arg1, %c0_i32 : i32, i32, i32
  }
  func.func @transform_1(%arg0: i32, %arg1: i32) -> (i32, i32) {
    %c0_i32 = arith.constant 0 : i32
    %c0_i32_0 = arith.constant 0 : i32
    %c0_i32_1 = arith.constant 0 : i32
    return %c0_i32, %c0_i32_0 : i32, i32
  }
  func.func @transform_2(%arg0: i32, %arg1: i32) -> (i32, i32) {
    %c0_i32 = arith.constant 0 : i32
    %c0_i32_0 = arith.constant 0 : i32
    %c0_i32_1 = arith.constant 0 : i32
    return %c0_i32, %c0_i32_0 : i32, i32
  }
  func.func @transform_3(%arg0: i32, %arg1: i32) -> (i32, i32) {
    %c0_i32 = arith.constant 0 : i32
    %c0_i32_0 = arith.constant 0 : i32
    %c0_i32_1 = arith.constant 0 : i32
    return %c0_i32, %c0_i32_0 : i32, i32
  }
  func.func @transform_4(%arg0: i32, %arg1: i32) -> (i32, i32) {
    %c0_i32 = arith.constant 0 : i32
    %c0_i32_0 = arith.constant 0 : i32
    %c0_i32_1 = arith.constant 0 : i32
    return %c0_i32, %c0_i32_0 : i32, i32
  }
  func.func @transform_5(%arg0: i32, %arg1: i32) -> (i32, i32, i32, i32) {
    %c0_i32 = arith.constant 0 : i32
    %c0_i32_0 = arith.constant 0 : i32
    %c0_i32_1 = arith.constant 0 : i32
    return %arg0, %c0_i32, %arg1, %c0_i32_0 : i32, i32, i32, i32
  }
  func.func @transform_6(%arg0: i32, %arg1: i32) -> (i32, i32, i32, i32) {
    %c0_i32 = arith.constant 0 : i32
    %c0_i32_0 = arith.constant 0 : i32
    %c0_i32_1 = arith.constant 0 : i32
    return %arg0, %c0_i32, %c0_i32_0, %arg1 : i32, i32, i32, i32
  }
  func.func @transform_7(%arg0: i32, %arg1: i32) -> (i32, i32, i32, i32) {
    %c0_i32 = arith.constant 0 : i32
    %c0_i32_0 = arith.constant 0 : i32
    %c0_i32_1 = arith.constant 0 : i32
    return %arg0, %c0_i32, %arg1, %c0_i32_0 : i32, i32, i32, i32
  }
}

module attributes {stable_mosaic.version = 11 : i64} {
  func.func @_ln_qkv_kernel(%arg0: i32, %arg1: i32, %arg2: memref<1x8x32xf32, #tpu.memory_space<vmem>>, %arg3: memref<1x32xf32, #tpu.memory_space<vmem>>, %arg4: memref<1x32xf32, #tpu.memory_space<vmem>>, %arg5: memref<32x96xbf16, #tpu.memory_space<vmem>>, %arg6: memref<1x96xf32, #tpu.memory_space<vmem>>, %arg7: memref<1x4x8x8xbf16, #tpu.memory_space<vmem>>, %arg8: memref<1x4x8x8xbf16, #tpu.memory_space<vmem>>, %arg9: memref<1x4x8x8xbf16, #tpu.memory_space<vmem>>) attributes {dimension_semantics = [#tpu.dimension_semantics<parallel>, #tpu.dimension_semantics<parallel>], iteration_bounds = array<i64: 2, 1>, scalar_prefetch = 0 : i64, scratch_operands = 0 : i64, tpu.core_type = #tpu.core_type<tc>, window_params = [{transform_indices = @transform_0, window_bounds = array<i64: 1, 8, 32>}, {pipeline_mode = #tpu.pipeline_mode<synchronous>, transform_indices = @transform_1, window_bounds = array<i64: 1, 32>}, {pipeline_mode = #tpu.pipeline_mode<synchronous>, transform_indices = @transform_2, window_bounds = array<i64: 1, 32>}, {pipeline_mode = #tpu.pipeline_mode<synchronous>, transform_indices = @transform_3, window_bounds = array<i64: 32, 96>}, {pipeline_mode = #tpu.pipeline_mode<synchronous>, transform_indices = @transform_4, window_bounds = array<i64: 1, 96>}, {transform_indices = @transform_5, window_bounds = array<i64: 1, 4, 8, 8>}, {transform_indices = @transform_6, window_bounds = array<i64: 1, 4, 8, 8>}, {transform_indices = @transform_7, window_bounds = array<i64: 1, 4, 8, 8>}]} {
    %c0 = arith.constant 0 : index
    %c0_0 = arith.constant 0 : index
    %c0_1 = arith.constant 0 : index
    %0 = vector.load %arg2[%c0, %c0_0, %c0_1] : memref<1x8x32xf32, #tpu.memory_space<vmem>>, vector<1x8x32xf32>
    %1 = vector.shape_cast %0 : vector<1x8x32xf32> to vector<8x32xf32>
    %cst = arith.constant dense<0.000000e+00> : vector<8xf32>
    %2 = vector.multi_reduction <add>, %1, %cst [1] : vector<8x32xf32> to vector<8xf32>
    %3 = vector.shape_cast %2 : vector<8xf32> to vector<8x1xf32>
    %cst_2 = arith.constant 3.200000e+01 : f32
    %4 = vector.broadcast %cst_2 : f32 to vector<8x1xf32>
    %5 = arith.divf %3, %4 : vector<8x1xf32>
    %6 = vector.broadcast %5 : vector<8x1xf32> to vector<8x32xf32>
    %7 = arith.subf %1, %6 : vector<8x32xf32>
    %8 = arith.mulf %7, %7 : vector<8x32xf32>
    %cst_3 = arith.constant dense<0.000000e+00> : vector<8xf32>
    %9 = vector.multi_reduction <add>, %8, %cst_3 [1] : vector<8x32xf32> to vector<8xf32>
    %10 = vector.shape_cast %9 : vector<8xf32> to vector<8x1xf32>
    %cst_4 = arith.constant 3.200000e+01 : f32
    %11 = vector.broadcast %cst_4 : f32 to vector<8x1xf32>
    %12 = arith.divf %10, %11 : vector<8x1xf32>
    %13 = vector.broadcast %5 : vector<8x1xf32> to vector<8x32xf32>
    %14 = arith.subf %1, %13 : vector<8x32xf32>
    %cst_5 = arith.constant 9.99999974E-6 : f32
    %15 = vector.broadcast %cst_5 : f32 to vector<8x1xf32>
    %16 = arith.addf %12, %15 : vector<8x1xf32>
    %17 = math.rsqrt %16 : vector<8x1xf32>
    %18 = vector.broadcast %17 : vector<8x1xf32> to vector<8x32xf32>
    %19 = arith.mulf %14, %18 : vector<8x32xf32>
    %c0_6 = arith.constant 0 : index
    %c0_7 = arith.constant 0 : index
    %20 = vector.load %arg3[%c0_6, %c0_7] : memref<1x32xf32, #tpu.memory_space<vmem>>, vector<1x32xf32>
    %21 = vector.broadcast %20 : vector<1x32xf32> to vector<8x32xf32>
    %22 = arith.mulf %19, %21 : vector<8x32xf32>
    %c0_8 = arith.constant 0 : index
    %c0_9 = arith.constant 0 : index
    %23 = vector.load %arg4[%c0_8, %c0_9] : memref<1x32xf32, #tpu.memory_space<vmem>>, vector<1x32xf32>
    %24 = vector.broadcast %23 : vector<1x32xf32> to vector<8x32xf32>
    %25 = arith.addf %22, %24 : vector<8x32xf32>
    %26 = arith.truncf %25 : vector<8x32xf32> to vector<8x32xbf16>
    %c0_10 = arith.constant 0 : index
    %c0_11 = arith.constant 0 : index
    %27 = vector.load %arg5[%c0_10, %c0_11] : memref<32x96xbf16, #tpu.memory_space<vmem>>, vector<32x96xbf16>
    %cst_12 = arith.constant dense<0.000000e+00> : vector<8x96xf32>
    %28 = tpu.matmul %26, %27, %cst_12 {dimension_numbers = #tpu.dot_dimension_numbers<[1], [0], [0], [1], [0, 0, 1, 1], [], []>} : vector<8x32xbf16>, vector<32x96xbf16>, vector<8x96xf32> -> vector<8x96xf32>
    %c0_13 = arith.constant 0 : index
    %c0_14 = arith.constant 0 : index
    %29 = vector.load %arg6[%c0_13, %c0_14] : memref<1x96xf32, #tpu.memory_space<vmem>>, vector<1x96xf32>
    %30 = vector.broadcast %29 : vector<1x96xf32> to vector<8x96xf32>
    %31 = arith.addf %28, %30 : vector<8x96xf32>
    %32 = vector.extract_strided_slice %31 {offsets = [0, 0], sizes = [8, 32], strides = [1, 1]} : vector<8x96xf32> to vector<8x32xf32>
    %cst_15 = arith.constant 0.353553385 : f32
    %33 = vector.broadcast %cst_15 : f32 to vector<8x32xf32>
    %34 = arith.mulf %32, %33 : vector<8x32xf32>
    %35 = vector.extract_strided_slice %31 {offsets = [0, 32], sizes = [8, 32], strides = [1, 1]} : vector<8x96xf32> to vector<8x32xf32>
    %36 = vector.extract_strided_slice %31 {offsets = [0, 64], sizes = [8, 32], strides = [1, 1]} : vector<8x96xf32> to vector<8x32xf32>
    %37 = vector.shape_cast %34 : vector<8x32xf32> to vector<8x4x8xf32>
    %38 = tpu.transpose %37, [1, 0, 2] : vector<8x4x8xf32> -> vector<4x8x8xf32>
    %39 = arith.truncf %38 : vector<4x8x8xf32> to vector<4x8x8xbf16>
    %c0_16 = arith.constant 0 : index
    %c0_17 = arith.constant 0 : index
    %c0_18 = arith.constant 0 : index
    %c0_19 = arith.constant 0 : index
    %40 = vector.load %arg7[%c0_16, %c0_17, %c0_18, %c0_19] : memref<1x4x8x8xbf16, #tpu.memory_space<vmem>>, vector<1x4x8x8xbf16>
    %41 = vector.shape_cast %40 : vector<1x4x8x8xbf16> to vector<4x8x8xbf16>
    %42 = vector.shape_cast %39 : vector<4x8x8xbf16> to vector<1x4x8x8xbf16>
    tpu.vector_store %arg7[%c0_16, %c0_17, %c0_18, %c0_19], %42 {strides = array<i32>} : memref<1x4x8x8xbf16, #tpu.memory_space<vmem>>, vector<1x4x8x8xbf16>,
    %43 = tpu.transpose %35, [1, 0] : vector<8x32xf32> -> vector<32x8xf32>
    %44 = vector.shape_cast %43 : vector<32x8xf32> to vector<4x8x8xf32>
    %45 = arith.truncf %44 : vector<4x8x8xf32> to vector<4x8x8xbf16>
    %c0_20 = arith.constant 0 : index
    %c0_21 = arith.constant 0 : index
    %c0_22 = arith.constant 0 : index
    %c0_23 = arith.constant 0 : index
    %46 = vector.load %arg8[%c0_20, %c0_21, %c0_22, %c0_23] : memref<1x4x8x8xbf16, #tpu.memory_space<vmem>>, vector<1x4x8x8xbf16>
    %47 = vector.shape_cast %46 : vector<1x4x8x8xbf16> to vector<4x8x8xbf16>
    %48 = vector.shape_cast %45 : vector<4x8x8xbf16> to vector<1x4x8x8xbf16>
    tpu.vector_store %arg8[%c0_20, %c0_21, %c0_22, %c0_23], %48 {strides = array<i32>} : memref<1x4x8x8xbf16, #tpu.memory_space<vmem>>, vector<1x4x8x8xbf16>,
    %49 = vector.shape_cast %36 : vector<8x32xf32> to vector<8x4x8xf32>
    %50 = tpu.transpose %49, [1, 0, 2] : vector<8x4x8xf32> -> vector<4x8x8xf32>
    %51 = arith.truncf %50 : vector<4x8x8xf32> to vector<4x8x8xbf16>
    %c0_24 = arith.constant 0 : index
    %c0_25 = arith.constant 0 : index
    %c0_26 = arith.constant 0 : index
    %c0_27 = arith.constant 0 : index
    %52 = vector.load %arg9[%c0_24, %c0_25, %c0_26, %c0_27] : memref<1x4x8x8xbf16, #tpu.memory_space<vmem>>, vector<1x4x8x8xbf16>
    %53 = vector.shape_cast %52 : vector<1x4x8x8xbf16> to vector<4x8x8xbf16>
    %54 = vector.shape_cast %51 : vector<4x8x8xbf16> to vector<1x4x8x8xbf16>
    tpu.vector_store %arg9[%c0_24, %c0_25, %c0_26, %c0_27], %54 {strides = array<i32>} : memref<1x4x8x8xbf16, #tpu.memory_space<vmem>>, vector<1x4x8x8xbf16>,
    return
  }
  func.func @transform_0(%arg0: i32, %arg1: i32) -> (i32, i32, i32) {
    %c0_i32 = arith.constant 0 : i32
    %c0_i32_0 = arith.constant 0 : i32
    return %arg0, %arg1, %c0_i32 : i32, i32, i32
  }
  func.func @transform_1(%arg0: i32, %arg1: i32) -> (i32, i32) {
    %c0_i32 = arith.constant 0 : i32
    %c0_i32_0 = arith.constant 0 : i32
    %c0_i32_1 = arith.constant 0 : i32
    return %c0_i32, %c0_i32_0 : i32, i32
  }
  func.func @transform_2(%arg0: i32, %arg1: i32) -> (i32, i32) {
    %c0_i32 = arith.constant 0 : i32
    %c0_i32_0 = arith.constant 0 : i32
    %c0_i32_1 = arith.constant 0 : i32
    return %c0_i32, %c0_i32_0 : i32, i32
  }
  func.func @transform_3(%arg0: i32, %arg1: i32) -> (i32, i32) {
    %c0_i32 = arith.constant 0 : i32
    %c0_i32_0 = arith.constant 0 : i32
    %c0_i32_1 = arith.constant 0 : i32
    return %c0_i32, %c0_i32_0 : i32, i32
  }
  func.func @transform_4(%arg0: i32, %arg1: i32) -> (i32, i32) {
    %c0_i32 = arith.constant 0 : i32
    %c0_i32_0 = arith.constant 0 : i32
    %c0_i32_1 = arith.constant 0 : i32
    return %c0_i32, %c0_i32_0 : i32, i32
  }
  func.func @transform_5(%arg0: i32, %arg1: i32) -> (i32, i32, i32, i32) {
    %c0_i32 = arith.constant 0 : i32
    %c0_i32_0 = arith.constant 0 : i32
    %c0_i32_1 = arith.constant 0 : i32
    return %arg0, %c0_i32, %arg1, %c0_i32_0 : i32, i32, i32, i32
  }
  func.func @transform_6(%arg0: i32, %arg1: i32) -> (i32, i32, i32, i32) {
    %c0_i32 = arith.constant 0 : i32
    %c0_i32_0 = arith.constant 0 : i32
    %c0_i32_1 = arith.constant 0 : i32
    return %arg0, %c0_i32, %c0_i32_0, %arg1 : i32, i32, i32, i32
  }
  func.func @transform_7(%arg0: i32, %arg1: i32) -> (i32, i32, i32, i32) {
    %c0_i32 = arith.constant 0 : i32
    %c0_i32_0 = arith.constant 0 : i32
    %c0_i32_1 = arith.constant 0 : i32
    return %arg0, %c0_i32, %arg1, %c0_i32_0 : i32, i32, i32, i32
  }
}

</mosaic_0001>

<llo_original>
// kernel: tpu_custom_call.1
$region0: #{tpu_custom_call.1}
  #allocation0 [shape = 'u32[]', space=smem, size = 0x4, offset = 0x4, fixed_abs, tag = 'smem constant byte address 0x4 - core index']
  #allocation1 [shape = 'u32[144,128]{1,0:T(1,128)}', space=vmem, size = 0x12000, scoped, tag = 'internal scratch']
  %s0 = inlined_call_operand.hbm [shape: f32[2,8,32], index: 0, kind: input, shape index: {}]
  %s1 = inlined_call_operand.vmem [shape: f32[1,32], index: 1, kind: input, shape index: {}]
  %s2 = inlined_call_operand.vmem [shape: f32[1,32], index: 2, kind: input, shape index: {}]
  %s3 = inlined_call_operand.hbm [shape: bf16[32,96], index: 3, kind: input, shape index: {}]
  %s4 = inlined_call_operand.vmem [shape: f32[1,96], index: 4, kind: input, shape index: {}]
  %s5 = inlined_call_operand.hbm [shape: bf16[2,4,8,8], index: 5, kind: output, shape index: {0}]
  %s6 = inlined_call_operand.hbm [shape: bf16[2,4,8,8], index: 6, kind: output, shape index: {1}]
  %s7 = inlined_call_operand.hbm [shape: bf16[2,4,8,8], index: 7, kind: output, shape index: {2}]
  %8 = xla_tuple %s5, %s6, %s7
  %s9 = sld [smem:[#allocation0]]
  $region77: #{tpu_custom_call.1} parent=0
    _
  %s11 = ssub.s32 1, %s9
  %s12 = scalar_select 0, %s11, %s9
  $region1: #{tpu_custom_call.1} parent=0
    #allocation2 [shape = 'u8[8192]{0}', space=vmem, size = 0x2000, scoped, tag = 'input window, operand 0']
    #allocation3 [shape = 's32[2]{0}', space=sflag, size = 0x8, scoped, tag = 'scoped memory for tpu_custom_call.1']
    #allocation4 [shape = 's32[2]{0}', space=sflag, size = 0x8, scoped, tag = 'scoped memory for tpu_custom_call.1']
    #allocation5 [shape = 'u8[8192]{0}', space=vmem, size = 0x2000, scoped, tag = 'input window, operand 3, single buffered']
    #allocation6 [shape = 's32[1]{0}', space=sflag, size = 0x4, scoped, tag = 'scoped memory for tpu_custom_call.1']
    #allocation7 [shape = 'u8[16384]{0}', space=vmem, size = 0x4000, scoped, tag = 'output window, operand 0']
    #allocation8 [shape = 'u8[16384]{0}', space=vmem, size = 0x4000, scoped, tag = 'output window, operand 1']
    #allocation9 [shape = 's32[2]{0}', space=sflag, size = 0x8, scoped, tag = 'scoped memory for tpu_custom_call.1']
    #allocation10 [shape = 'u8[16384]{0}', space=vmem, size = 0x4000, scoped, tag = 'output window, operand 2']
    %13 = vsyncpa [#allocation3], 0
    %s14 = scalar_lea.sflag [#allocation3], 1
    %15 = vsyncpa %s14, 0
    %16 = vsyncpa [#allocation6], 0
    %17 = vsyncpa [#allocation4], 0
    %s18 = scalar_lea.sflag [#allocation4], 1
    %19 = vsyncpa %s18, 0
    %20 = vsyncpa [#allocation9], 0
    %s21 = scalar_lea.sflag [#allocation9], 1
    %22 = vsyncpa %s21, 0
    loop: start=0, step=1, limit=4
    $region2: #{tpu_custom_call.1} parent=1 // loop_pre_header
      _
    $region3: #{tpu_custom_call.1} parent=1 // loop_header
      %s24 = sphi 0, %s28
      %p25 = scmp.ge.s32.totalorder %s24, 4
      %s31 = sphi 0, %s43
      %s32 = sphi 0, %s39
      %s33 = sphi 0, %s31
      %s34 = sphi 0, %s32
      %s35 = sphi 0, %s33
      %s36 = sphi 0, %s34
      %s48 = sphi 0, %s50
      %s51 = sphi 0, %s48
      %s52 = sphi 0, %s51
      %s68 = sphi 0, %s52
      %s72 = sphi 0, %s72
      %s74 = sphi 0, %s72
      %s75 = sphi 0, %s74
      %s89 = sphi 0, %s75
      %s93 = sphi 0, %s93
      %s95 = sphi 0, %s93
      %s96 = sphi 0, %s95
      %s110 = sphi 0, %s96
      %s114 = sphi 0, %s114
      %s116 = sphi 0, %s114
      %s117 = sphi 0, %s116
      %s131 = sphi 0, %s117
      %s135 = sphi 0, %s135
      %s137 = sphi 0, %s135
      %s138 = sphi 0, %s137
      %s152 = sphi 0, %s138
      %s160 = sphi 0, %s162
      %s163 = sphi 0, %s160
      %s164 = sphi 0, %s163
      %s180 = sphi 0, %s164
      %s188 = sphi 0, %s190
      %s191 = sphi 0, %s188
      %s192 = sphi 0, %s191
      %s208 = sphi 0, %s192
      %s216 = sphi 0, %s218
      %s219 = sphi 0, %s216
      %s220 = sphi 0, %s219
      %s236 = sphi 0, %s220
    $region4: #{tpu_custom_call.1} parent=1 // loop_header_branch
      %27 = sbr.rel (%p25) target = $region8
    $region5: #{tpu_custom_call.1} parent=1 // loop_body
      %s29 = ssub.s32 %s24, 1
      %s30 = ssub.s32 %s24, 2
      %s37 = sadd.s32 1, %s32
      %p38 = scmp.ge.s32.totalorder %s37, 1
      %s39 = scalar_select %p38, 0, %s37
      %s40 = sadd.s32 1, %s31
      %s41 = scalar_select %p38, %s40, %s31
      %p42 = scmp.ge.s32.totalorder %s41, 2
      %s43 = scalar_select %p42, 0, %s41
      %s44 = ssub.s32 %s31, %s43
      %s45 = ssub.s32 %s32, %s39
      %s46 = sor.u32 %s44, %s45
      %p47 = scmp.eq.s32.totalorder %s46, 0
      %s49 = sadd.s32 %s48, 1
      %s50 = scalar_select %p47, %s48, %s49
      %p53 = pneg %p47
      %p54 = scmp.eq.s32.totalorder %s24, 1
      %p55 = por %p53, %p54
      %p56 = scmp.ne.s32.totalorder %s48, %s51
      %p57 = scmp.eq.s32.totalorder %s24, 0
      %p58 = por %p56, %p57
      %p59 = scmp.ne.s32.totalorder %s48, %s51
      %p60 = scmp.eq.s32.totalorder %s29, 1
      %p61 = por %p59, %p60
      %p62 = scmp.ne.s32.totalorder %s51, %s52
      %p63 = scmp.eq.s32.totalorder %s29, 0
      %p64 = por %p62, %p63
      %p65 = scmp.ne.s32.totalorder %s51, %s52
      %p66 = scmp.eq.s32.totalorder %s30, 1
      %p67 = por %p65, %p66
      %p69 = scmp.ne.s32.totalorder %s52, %s68
      %p70 = scmp.eq.s32.totalorder %s30, 0
      %p71 = por %p69, %p70
      %s73 = sadd.s32 %s72, 1
      %p76 = scmp.eq.s32.totalorder %s24, 1
      %p77 = scmp.ne.s32.totalorder %s72, %s74
      %p78 = scmp.eq.s32.totalorder %s24, 0
      %p79 = por %p77, %p78
      %p80 = scmp.ne.s32.totalorder %s72, %s74
      %p81 = scmp.eq.s32.totalorder %s29, 1
      %p82 = por %p80, %p81
      %p83 = scmp.ne.s32.totalorder %s74, %s75
      %p84 = scmp.eq.s32.totalorder %s29, 0
      %p85 = por %p83, %p84
      %p86 = scmp.ne.s32.totalorder %s74, %s75
      %p87 = scmp.eq.s32.totalorder %s30, 1
      %p88 = por %p86, %p87
      %p90 = scmp.ne.s32.totalorder %s75, %s89
      %p91 = scmp.eq.s32.totalorder %s30, 0
      %p92 = por %p90, %p91
      %s94 = sadd.s32 %s93, 1
      %p97 = scmp.eq.s32.totalorder %s24, 1
      %p98 = scmp.ne.s32.totalorder %s93, %s95
      %p99 = scmp.eq.s32.totalorder %s24, 0
      %p100 = por %p98, %p99
      %p101 = scmp.ne.s32.totalorder %s93, %s95
      %p102 = scmp.eq.s32.totalorder %s29, 1
      %p103 = por %p101, %p102
      %p104 = scmp.ne.s32.totalorder %s95, %s96
      %p105 = scmp.eq.s32.totalorder %s29, 0
      %p106 = por %p104, %p105
      %p107 = scmp.ne.s32.totalorder %s95, %s96
      %p108 = scmp.eq.s32.totalorder %s30, 1
      %p109 = por %p107, %p108
      %p111 = scmp.ne.s32.totalorder %s96, %s110
      %p112 = scmp.eq.s32.totalorder %s30, 0
      %p113 = por %p111, %p112
      %s115 = sadd.s32 %s114, 1
      %p118 = scmp.eq.s32.totalorder %s24, 1
      %p119 = scmp.ne.s32.totalorder %s114, %s116
      %p120 = scmp.eq.s32.totalorder %s24, 0
      %p121 = por %p119, %p120
      %p122 = scmp.ne.s32.totalorder %s114, %s116
      %p123 = scmp.eq.s32.totalorder %s29, 1
      %p124 = por %p122, %p123
      %p125 = scmp.ne.s32.totalorder %s116, %s117
      %p126 = scmp.eq.s32.totalorder %s29, 0
      %p127 = por %p125, %p126
      %p128 = scmp.ne.s32.totalorder %s116, %s117
      %p129 = scmp.eq.s32.totalorder %s30, 1
      %p130 = por %p128, %p129
      %p132 = scmp.ne.s32.totalorder %s117, %s131
      %p133 = scmp.eq.s32.totalorder %s30, 0
      %p134 = por %p132, %p133
      %s136 = sadd.s32 %s135, 1
      %p139 = scmp.eq.s32.totalorder %s24, 1
      %p140 = scmp.ne.s32.totalorder %s135, %s137
      %p141 = scmp.eq.s32.totalorder %s24, 0
      %p142 = por %p140, %p141
      %p143 = scmp.ne.s32.totalorder %s135, %s137
      %p144 = scmp.eq.s32.totalorder %s29, 1
      %p145 = por %p143, %p144
      %p146 = scmp.ne.s32.totalorder %s137, %s138
      %p147 = scmp.eq.s32.totalorder %s29, 0
      %p148 = por %p146, %p147
      %p149 = scmp.ne.s32.totalorder %s137, %s138
      %p150 = scmp.eq.s32.totalorder %s30, 1
      %p151 = por %p149, %p150
      %p153 = scmp.ne.s32.totalorder %s138, %s152
      %p154 = scmp.eq.s32.totalorder %s30, 0
      %p155 = por %p153, %p154
      %s156 = ssub.s32 %s31, %s43
      %s157 = ssub.s32 %s32, %s39
      %s158 = sor.u32 %s156, %s157
      %p159 = scmp.eq.s32.totalorder %s158, 0
      %s161 = sadd.s32 %s160, 1
      %s162 = scalar_select %p159, %s160, %s161
      %p165 = pneg %p159
      %p166 = scmp.eq.s32.totalorder %s24, 1
      %p167 = por %p165, %p166
      %p168 = scmp.ne.s32.totalorder %s160, %s163
      %p169 = scmp.eq.s32.totalorder %s24, 0
      %p170 = por %p168, %p169
      %p171 = scmp.ne.s32.totalorder %s160, %s163
      %p172 = scmp.eq.s32.totalorder %s29, 1
      %p173 = por %p171, %p172
      %p174 = scmp.ne.s32.totalorder %s163, %s164
      %p175 = scmp.eq.s32.totalorder %s29, 0
      %p176 = por %p174, %p175
      %p177 = scmp.ne.s32.totalorder %s163, %s164
      %p178 = scmp.eq.s32.totalorder %s30, 1
      %p179 = por %p177, %p178
      %p181 = scmp.ne.s32.totalorder %s164, %s180
      %p182 = scmp.eq.s32.totalorder %s30, 0
      %p183 = por %p181, %p182
      %s184 = ssub.s32 %s31, %s43
      %s185 = ssub.s32 %s32, %s39
      %s186 = sor.u32 %s184, %s185
      %p187 = scmp.eq.s32.totalorder %s186, 0
      %s189 = sadd.s32 %s188, 1
      %s190 = scalar_select %p187, %s188, %s189
      %p193 = pneg %p187
      %p194 = scmp.eq.s32.totalorder %s24, 1
      %p195 = por %p193, %p194
      %p196 = scmp.ne.s32.totalorder %s188, %s191
      %p197 = scmp.eq.s32.totalorder %s24, 0
      %p198 = por %p196, %p197
      %p199 = scmp.ne.s32.totalorder %s188, %s191
      %p200 = scmp.eq.s32.totalorder %s29, 1
      %p201 = por %p199, %p200
      %p202 = scmp.ne.s32.totalorder %s191, %s192
      %p203 = scmp.eq.s32.totalorder %s29, 0
      %p204 = por %p202, %p203
      %p205 = scmp.ne.s32.totalorder %s191, %s192
      %p206 = scmp.eq.s32.totalorder %s30, 1
      %p207 = por %p205, %p206
      %p209 = scmp.ne.s32.totalorder %s192, %s208
      %p210 = scmp.eq.s32.totalorder %s30, 0
      %p211 = por %p209, %p210
      %s212 = ssub.s32 %s31, %s43
      %s213 = ssub.s32 %s32, %s39
      %s214 = sor.u32 %s212, %s213
      %p215 = scmp.eq.s32.totalorder %s214, 0
      %s217 = sadd.s32 %s216, 1
      %s218 = scalar_select %p215, %s216, %s217
      %p221 = pneg %p215
      %p222 = scmp.eq.s32.totalorder %s24, 1
      %p223 = por %p221, %p222
      %p224 = scmp.ne.s32.totalorder %s216, %s219
      %p225 = scmp.eq.s32.totalorder %s24, 0
      %p226 = por %p224, %p225
      %p227 = scmp.ne.s32.totalorder %s216, %s219
      %p228 = scmp.eq.s32.totalorder %s29, 1
      %p229 = por %p227, %p228
      %p230 = scmp.ne.s32.totalorder %s219, %s220
      %p231 = scmp.eq.s32.totalorder %s29, 0
      %p232 = por %p230, %p231
      %p233 = scmp.ne.s32.totalorder %s219, %s220
      %p234 = scmp.eq.s32.totalorder %s30, 1
      %p235 = por %p233, %p234
      %p237 = scmp.ne.s32.totalorder %s220, %s236
      %p238 = scmp.eq.s32.totalorder %s30, 0
      %p239 = por %p237, %p238
      %p240 = scmp.le.s32.totalorder 1, %s24
      %p241 = scmp.lt.s32.totalorder %s24, 3
      %p242 = pnand %p240, %p241
      %p243 = pneg %p242
      // Predicated region
      $region9: #{tpu_custom_call.1} parent=5 // pred_check
        _
      $region10: #{tpu_custom_call.1} parent=5 // pred_check_branch
        %245 = sbr.rel (%p242) target = $region12
      $region11: #{tpu_custom_call.1} parent=5 // pred_region
        %s246 = ssub.s32 %s24, 1
        // Predicated region
        $region13: #{tpu_custom_call.1} parent=11 // pred_check
          %p247 = pneg %p85
        $region14: #{tpu_custom_call.1} parent=11 // pred_check_branch
          %249 = sbr.rel (%p247) target = $region16
        $region15: #{tpu_custom_call.1} parent=11 // pred_region
          _
        $region16: #{tpu_custom_call.1} parent=11 // pred_fallthru
          _
        // Predicated region
        $region17: #{tpu_custom_call.1} parent=11 // pred_check
          %p250 = pneg %p106
        $region18: #{tpu_custom_call.1} parent=11 // pred_check_branch
          %252 = sbr.rel (%p250) target = $region20
        $region19: #{tpu_custom_call.1} parent=11 // pred_region
          _
        $region20: #{tpu_custom_call.1} parent=11 // pred_fallthru
          _
        // Predicated region
        $region21: #{tpu_custom_call.1} parent=11 // pred_check
          %p253 = pneg %p127
        $region22: #{tpu_custom_call.1} parent=11 // pred_check_branch
          %255 = sbr.rel (%p253) target = $region24
        $region23: #{tpu_custom_call.1} parent=11 // pred_region
          %s257 = ssub.s32 256, 256
          %258 = vsyncadd [#allocation6], %s257
          %s259 = sshll.u32 [#allocation5], 4
          %s260 = int_to_ptr.vmem [resolvable:$true] %s259
          %265 = dma.hbm_to_vmem [thread:$0]  %s3, 256, %s260, [#allocation6], 64, 64, 4
        $region24: #{tpu_custom_call.1} parent=11 // pred_fallthru
          _
        // Predicated region
        $region25: #{tpu_custom_call.1} parent=11 // pred_check
          %p266 = pneg %p148
        $region26: #{tpu_custom_call.1} parent=11 // pred_check_branch
          %268 = sbr.rel (%p266) target = $region28
        $region27: #{tpu_custom_call.1} parent=11 // pred_region
          _
        $region28: #{tpu_custom_call.1} parent=11 // pred_fallthru
          _
      $region12: #{tpu_custom_call.1} parent=5 // pred_fallthru
        _
      %p269 = scmp.lt.s32.totalorder %s24, 2
      // Predicated region
      $region29: #{tpu_custom_call.1} parent=5 // pred_check
        %p270 = pneg %p269
      $region30: #{tpu_custom_call.1} parent=5 // pred_check_branch
        %272 = sbr.rel (%p270) target = $region32
      $region31: #{tpu_custom_call.1} parent=5 // pred_region
        // Predicated region
        $region33: #{tpu_custom_call.1} parent=31 // pred_check
          %p273 = pneg %p58
        $region34: #{tpu_custom_call.1} parent=31 // pred_check_branch
          %275 = sbr.rel (%p273) target = $region36
        $region35: #{tpu_custom_call.1} parent=31 // pred_region
          %s276 = sand.u32 %s48, 1
          %s277 = scalar_lea.sflag [#allocation3], %s276
          %s278 = sand.u32 %s48, 1
          %s279 = smul.addr %s278, 8
          %s280 = scalar_lea.vmem [#allocation2], %s279
          %s282 = ssub.s32 128, 128
          %283 = vsyncadd %s277, %s282
          %s284 = sadd.s32 %s32, %s31
          %s285 = smul.addr %s284, 128
          %s286 = scalar_lea.hbm %s0, %s285
          %s288 = sshll.u32 %s280, 4
          %s289 = int_to_ptr.vmem [resolvable:$true] %s288
          %291 = dma.hbm_to_vmem [thread:$0]  %s286, 128, %s289, %s277
        $region36: #{tpu_custom_call.1} parent=31 // pred_fallthru
          _
      $region32: #{tpu_custom_call.1} parent=5 // pred_fallthru
        _
      %p292 = scmp.le.s32.totalorder 1, %s24
      %p293 = scmp.lt.s32.totalorder %s24, 3
      %p294 = pnand %p292, %p293
      %p295 = pneg %p294
      // Predicated region
      $region37: #{tpu_custom_call.1} parent=5 // pred_check
        _
      $region38: #{tpu_custom_call.1} parent=5 // pred_check_branch
        %297 = sbr.rel (%p294) target = $region40
      $region39: #{tpu_custom_call.1} parent=5 // pred_region
        %s298 = ssub.s32 %s24, 1
        %s299 = sand.u32 %s51, 1
        %s300 = scalar_lea.sflag [#allocation3], %s299
        %s301 = sand.u32 %s51, 1
        %s302 = smul.addr %s301, 8
        %s303 = scalar_lea.vmem [#allocation2], %s302
        // Predicated region
        $region41: #{tpu_custom_call.1} parent=39 // pred_check
          %p304 = pneg %p64
        $region42: #{tpu_custom_call.1} parent=39 // pred_check_branch
          %306 = sbr.rel (%p304) target = $region44
        $region43: #{tpu_custom_call.1} parent=39 // pred_region
          %307 = dma.done %s300, 128
        $region44: #{tpu_custom_call.1} parent=39 // pred_fallthru
          _
        // Predicated region
        $region45: #{tpu_custom_call.1} parent=39 // pred_check
          %p308 = pneg %p127
        $region46: #{tpu_custom_call.1} parent=39 // pred_check_branch
          %310 = sbr.rel (%p308) target = $region48
        $region47: #{tpu_custom_call.1} parent=39 // pred_region
          %311 = dma.done [#allocation6], 256
        $region48: #{tpu_custom_call.1} parent=39 // pred_fallthru
          _
        %s312 = sand.u32 %s51, 1
        %s313 = scalar_lea.sflag [#allocation3], %s312
        %s314 = sand.u32 %s51, 1
        %s315 = smul.addr %s314, 8
        %s316 = scalar_lea.vmem [#allocation2], %s315
        %p317 = pneg %p64
        %p318 = pneg %p61
        %p319 = pneg %p85
        %p320 = pneg %p82
        %p321 = pneg %p106
        %p322 = pneg %p103
        %p323 = pneg %p127
        %p324 = pneg %p124
        %p325 = pneg %p148
        %p326 = pneg %p145
        %p327 = pneg %p176
        %p328 = pneg %p173
        %s329 = sand.u32 %s163, 1
        %s330 = scalar_lea.sflag [#allocation4], %s329
        %s331 = sand.u32 %s163, 1
        %s332 = smul.addr %s331, 16
        %s333 = scalar_lea.vmem [#allocation7], %s332
        %p334 = pneg %p204
        %p335 = pneg %p201
        %s336 = sand.u32 %s29, 1
        %s337 = scalar_lea.sflag [#allocation9], %s336
        %s338 = sand.u32 %s191, 1
        %s339 = smul.addr %s338, 16
        %s340 = scalar_lea.vmem [#allocation8], %s339
        %p341 = pneg %p232
        %p342 = pneg %p229
        %s343 = sand.u32 %s29, 1
        %s344 = scalar_lea.sflag [#allocation9], %s343
        %s345 = sand.u32 %s219, 1
        %s346 = smul.addr %s345, 16
        %s347 = scalar_lea.vmem [#allocation10], %s346
        %v349 = vld [vmem:[%s303] sm:$0xff]
        %vm350 = vcmask 261120
        %v351 = vsel %vm350, %v349, 0.0
        %352 = vadd.xlane.f32.xlu0 %v351
        %v353 = vpop.xlane.xlu0 %352
        %v354 = vrcp.pop 32.0
        %v355 = vmul.f32 %v353, %v354
        %v356 = vsub.f32 %v349, %v355
        %v357 = vmul.f32 %v356, %v356
        %v358 = vsel %vm350, %v357, 0.0
        %359 = vadd.xlane.f32.xlu0 %v358
        %v360 = vpop.xlane.xlu0 %359
        %v361 = vmul.f32 %v360, %v354
        %v362 = vadd.f32 %v361, 1e-05
        %v363 = vrsqrt.pop %v362
        %v364 = vmul.f32 %v356, %v363
        %v365 = vld [vmem:[%s1] sm:$0x1]
        %v367 = vlaneseq
        %v368 = vshrl.u32 %v367, 7
        %v369 = vsub.s32 0, %v368
        %v370 = vrot.slane %v365, %v369
        %v372 = vmul.f32 %v364, %v370
        %v373 = vld [vmem:[%s2] sm:$0x1]
        %v375 = vlaneseq
        %v376 = vshrl.u32 %v375, 7
        %v377 = vsub.s32 0, %v376
        %v378 = vrot.slane %v373, %v377
        %v380 = vadd.f32 %v372, %v378
        %v381 = vpack.c.bf16 %v380, %v380
        %v382 = vld [vmem:[#allocation5] sm:$0xf]
        %v383 = vld [vmem:[#allocation5 + $0x4] sm:$0xf]
        %v384 = vld [vmem:[#allocation5 + $0x8] sm:$0xf]
        %v385 = vld [vmem:[#allocation5 + $0xc] sm:$0xf]
        %v386 = vld [vmem:[%s4] sm:$0x1]
        %v388 = vlaneseq
        %v389 = vshrl.u32 %v388, 7
        %v390 = vsub.s32 0, %v389
        %v391 = vrot.slane %v386, %v390
        %v397 = vunpack.c.l.b16 %v382
        %v398 = vunpack.c.l.b16 %v383
        %v399 = vunpack.c.l.b16 %v384
        %v400 = vunpack.c.l.b16 %v385
        %v401 = vpack.c.b16 %v398, %v397
        %v402 = vpack.c.b16 %v400, %v399
        %v406 = vsel %vm350, %v381, 0
        %408 = vmatprep.subr.bf16.mxu0 0
        %409 = vmatpush1.bf16.msra.mxu0 %v401
        %410 = vmatprep.subr.bf16.mxu0 0
        %411 = vmatpush1.bf16.msra.mxu0 %v402
        %412 = vmatprep.subr.bf16.mxu0 0
        %413 = vmatpush1.bf16.msra.mxu0 0
        %414 = vmatprep.subr.bf16.mxu0 0
        %415 = vmatpush1.bf16.msra.mxu0 0
        %416 = vmatprep.subr.bf16.mxu0 0
        %417 = vmatpush1.bf16.msra.mxu0 0
        %418 = vmatprep.subr.bf16.mxu0 0
        %419 = vmatpush1.bf16.msra.mxu0 0
        %420 = vmatprep.subr.bf16.mxu0 0
        %421 = vmatpush1.bf16.msra.mxu0 0
        %422 = vmatprep.subr.bf16.mxu0 0
        %423 = vmatpush1.bf16.msra.mxu0 0
        %424 = vmatprep.subr.bf16.mxu0 0
        %425 = vmatpush1.bf16.msra.mxu0 0
        %426 = vmatprep.subr.bf16.mxu0 0
        %427 = vmatpush1.bf16.msra.mxu0 0
        %428 = vmatprep.subr.bf16.mxu0 0
        %429 = vmatpush1.bf16.msra.mxu0 0
        %430 = vmatprep.subr.bf16.mxu0 0
        %431 = vmatpush1.bf16.msra.mxu0 0
        %432 = vmatprep.subr.bf16.mxu0 0
        %433 = vmatpush1.bf16.msra.mxu0 0
        %434 = vmatprep.subr.bf16.mxu0 0
        %435 = vmatpush1.bf16.msra.mxu0 0
        %436 = vmatprep.subr.bf16.mxu0 0
        %437 = vmatpush1.bf16.msra.mxu0 0
        %438 = vmatprep.subr.bf16.mxu0 0
        %439 = vmatpush1.bf16.msra.mxu0 0
        %440 = vmatprep.mubr.bf16.mxu0 0
        %441 = vmatmul.mubr.bf16.gmra.mrb[0].mxu0 %v406
        %v442 = vpop.f32.mrb[0].mxu0
        %v443 = vadd.f32 %v391, %v442
        %v444 = vpop.f32.mrb[0].mxu0
        %v445 = vpop.f32.mrb[0].mxu0
        %v446 = vpop.f32.mrb[0].mxu0
        %447 = vdwg.mxu0
        %v448 = vmul.f32 %v443, 0.35355338
        %450 = vrot.lane.b32.xlu0 %v448, 120
        %v451 = vpop.permute.xlu0 %450
        %453 = vrot.lane.b32.xlu0 %v448, 112
        %v454 = vpop.permute.xlu0 %453
        %456 = vrot.lane.b32.xlu0 %v448, 104
        %v457 = vpop.permute.xlu0 %456
        %v459 = vcombine.low %v448, %v454
        %v460 = vcombine.high %v448, %v454
        %v462 = vunpack.c.l.s4 1983009808
        %v463 = vunpack.c.0.s8 %v462
        %v464 = vlaneseq
        %v465 = vshrl.u32 %v464, 7
        %v466 = vsub.s32 %v463, %v465
        %v467 = vrot.slane %v459, %v466
        %v469 = vunpack.c.l.s4 1983009808
        %v470 = vunpack.c.0.s8 %v469
        %v471 = vlaneseq
        %v472 = vshrl.u32 %v471, 7
        %v473 = vsub.s32 %v470, %v472
        %v474 = vrot.slane %v460, %v473
        %v475 = vcombine.low %v451, %v457
        %v476 = vcombine.high %v451, %v457
        %v478 = vunpack.c.l.s4 1983009808
        %v479 = vunpack.c.0.s8 %v478
        %v480 = vlaneseq
        %v481 = vshrl.u32 %v480, 7
        %v482 = vsub.s32 %v479, %v481
        %v483 = vrot.slane %v475, %v482
        %v485 = vunpack.c.l.s4 1983009808
        %v486 = vunpack.c.0.s8 %v485
        %v487 = vlaneseq
        %v488 = vshrl.u32 %v487, 7
        %v489 = vsub.s32 %v486, %v488
        %v490 = vrot.slane %v476, %v489
        %v491 = vcombine.low %v467, %v483
        %v492 = vcombine.high %v467, %v483
        %v494 = vunpack.c.l.s4 1934713408
        %v495 = vunpack.c.0.s8 %v494
        %v496 = vlaneseq
        %v497 = vshrl.u32 %v496, 7
        %v498 = vsub.s32 %v495, %v497
        %v499 = vrot.slane %v491, %v498
        %v501 = vunpack.c.l.s4 1934713408
        %v502 = vunpack.c.0.s8 %v501
        %v503 = vlaneseq
        %v504 = vshrl.u32 %v503, 7
        %v505 = vsub.s32 %v502, %v504
        %v506 = vrot.slane %v492, %v505
        %v507 = vcombine.low %v474, %v490
        %v508 = vcombine.high %v474, %v490
        %v510 = vunpack.c.l.s4 1934713408
        %v511 = vunpack.c.0.s8 %v510
        %v512 = vlaneseq
        %v513 = vshrl.u32 %v512, 7
        %v514 = vsub.s32 %v511, %v513
        %v515 = vrot.slane %v507, %v514
        %v517 = vunpack.c.l.s4 1934713408
        %v518 = vunpack.c.0.s8 %v517
        %v519 = vlaneseq
        %v520 = vshrl.u32 %v519, 7
        %v521 = vsub.s32 %v518, %v520
        %v522 = vrot.slane %v508, %v521
        %v523 = vcombine.high %v499, 0.0
        %v524 = vcombine.high %v506, 0.0
        %v525 = vcombine.high %v515, 0.0
        %v526 = vcombine.high %v522, 0.0
        %v527 = vcombine.low %v499, %v506
        %v529 = vunpack.c.l.s4 1983009808
        %v530 = vunpack.c.0.s8 %v529
        %v531 = vlaneseq
        %v532 = vshrl.u32 %v531, 7
        %v533 = vsub.s32 %v530, %v532
        %v534 = vrot.slane %v527, %v533
        %v535 = vcombine.low %v523, %v524
        %v537 = vunpack.c.l.s4 1983009808
        %v538 = vunpack.c.0.s8 %v537
        %v539 = vlaneseq
        %v540 = vshrl.u32 %v539, 7
        %v541 = vsub.s32 %v538, %v540
        %v542 = vrot.slane %v535, %v541
        %v543 = vcombine.low %v515, %v522
        %v545 = vunpack.c.l.s4 1983009808
        %v546 = vunpack.c.0.s8 %v545
        %v547 = vlaneseq
        %v548 = vshrl.u32 %v547, 7
        %v549 = vsub.s32 %v546, %v548
        %v550 = vrot.slane %v543, %v549
        %v551 = vcombine.low %v525, %v526
        %v553 = vunpack.c.l.s4 1983009808
        %v554 = vunpack.c.0.s8 %v553
        %v555 = vlaneseq
        %v556 = vshrl.u32 %v555, 7
        %v557 = vsub.s32 %v554, %v556
        %v558 = vrot.slane %v551, %v557
        %v559 = vcombine.low %v534, %v542
        %v560 = vcombine.high %v534, %v542
        %v562 = vunpack.c.l.s4 1934713408
        %v563 = vunpack.c.0.s8 %v562
        %v564 = vlaneseq
        %v565 = vshrl.u32 %v564, 7
        %v566 = vsub.s32 %v563, %v565
        %v567 = vrot.slane %v559, %v566
        %v569 = vunpack.c.l.s4 1934713408
        %v570 = vunpack.c.0.s8 %v569
        %v571 = vlaneseq
        %v572 = vshrl.u32 %v571, 7
        %v573 = vsub.s32 %v570, %v572
        %v574 = vrot.slane %v560, %v573
        %v575 = vcombine.low %v550, %v558
        %v576 = vcombine.high %v550, %v558
        %v578 = vunpack.c.l.s4 1934713408
        %v579 = vunpack.c.0.s8 %v578
        %v580 = vlaneseq
        %v581 = vshrl.u32 %v580, 7
        %v582 = vsub.s32 %v579, %v581
        %v583 = vrot.slane %v575, %v582
        %v585 = vunpack.c.l.s4 1934713408
        %v586 = vunpack.c.0.s8 %v585
        %v587 = vlaneseq
        %v588 = vshrl.u32 %v587, 7
        %v589 = vsub.s32 %v586, %v588
        %v590 = vrot.slane %v576, %v589
        %v591 = vcombine.low %v567, %v583
        %v592 = vcombine.high %v567, %v583
        %v593 = vcombine.low %v574, %v590
        %v594 = vcombine.high %v574, %v590
        %v595 = vpack.c.bf16 %v591, %v591
        %v596 = vpack.c.bf16 %v592, %v592
        %v597 = vpack.c.bf16 %v593, %v593
        %v598 = vpack.c.bf16 %v594, %v594
        %vm599 = vcmask 60416
        %600 = vst.msk [vmem:[%s333] sm:$0xf] %vm599, %v595
        %601 = vst.msk [vmem:[%s333 + $0x4] sm:$0xf] %vm599, %v596
        %602 = vst.msk [vmem:[%s333 + $0x8] sm:$0xf] %vm599, %v597
        %603 = vst.msk [vmem:[%s333 + $0xc] sm:$0xf] %vm599, %v598
        %605 = vrot.lane.b32.xlu0 %v443, 96
        %v606 = vpop.permute.xlu0 %605
        %608 = vxpose.xlu0.b32.start [1/16] %v606, 128
        %609 = vxpose.xlu0.b32.cont [2/16] 0.0, 128
        %610 = vxpose.xlu0.b32.cont [3/16] 0.0, 128
        %611 = vxpose.xlu0.b32.cont [4/16] 0.0, 128
        %612 = vxpose.xlu0.b32.cont [5/16] 0.0, 128
        %613 = vxpose.xlu0.b32.cont [6/16] 0.0, 128
        %614 = vxpose.xlu0.b32.cont [7/16] 0.0, 128
        %615 = vxpose.xlu0.b32.cont [8/16] 0.0, 128
        %616 = vxpose.xlu0.b32.cont [9/16] 0.0, 128
        %617 = vxpose.xlu0.b32.cont [10/16] 0.0, 128
        %618 = vxpose.xlu0.b32.cont [11/16] 0.0, 128
        %619 = vxpose.xlu0.b32.cont [12/16] 0.0, 128
        %620 = vxpose.xlu0.b32.cont [13/16] 0.0, 128
        %621 = vxpose.xlu0.b32.cont [14/16] 0.0, 128
        %622 = vxpose.xlu0.b32.cont [15/16] 0.0, 128
        %623 = vxpose.xlu0.b32.end [16/16] 0.0, 128
        %v624 = vpop.trf.xlu0
        %v625 = vpop.trf.xlu0
        %v626 = vpop.trf.xlu0
        %v627 = vpop.trf.xlu0
        %v628 = vpop.trf.xlu0
        %v629 = vpop.trf.xlu0
        %v630 = vpop.trf.xlu0
        %v631 = vpop.trf.xlu0
        %v632 = vpop.trf.xlu0
        %v633 = vpop.trf.xlu0
        %v634 = vpop.trf.xlu0
        %v635 = vpop.trf.xlu0
        %v636 = vpop.trf.xlu0
        %v637 = vpop.trf.xlu0
        %v638 = vpop.trf.xlu0
        %v639 = vpop.trf.xlu0
        %v640 = vpack.c.bf16 %v624, %v624
        %v641 = vpack.c.bf16 %v625, %v625
        %v642 = vpack.c.bf16 %v626, %v626
        %v643 = vpack.c.bf16 %v627, %v627
        %644 = vst.msk [vmem:[%s340] sm:$0xf] %vm599, %v640
        %645 = vst.msk [vmem:[%s340 + $0x4] sm:$0xf] %vm599, %v641
        %646 = vst.msk [vmem:[%s340 + $0x8] sm:$0xf] %vm599, %v642
        %647 = vst.msk [vmem:[%s340 + $0xc] sm:$0xf] %vm599, %v643
        %648 = vrot.lane.b32.xlu0 %v443, 120
        %v649 = vpop.permute.xlu0 %648
        %650 = vrot.lane.b32.xlu0 %v443, 112
        %v651 = vpop.permute.xlu0 %650
        %652 = vrot.lane.b32.xlu0 %v443, 104
        %v653 = vpop.permute.xlu0 %652
        %654 = vrot.lane.b32.xlu0 %v443, 64
        %v655 = vpop.permute.xlu0 %654
        %656 = vrot.lane.b32.xlu0 %v649, 64
        %v657 = vpop.permute.xlu0 %656
        %658 = vrot.lane.b32.xlu0 %v651, 64
        %v659 = vpop.permute.xlu0 %658
        %660 = vrot.lane.b32.xlu0 %v653, 64
        %v661 = vpop.permute.xlu0 %660
        %v666 = vcombine.low %v655, %v659
        %v667 = vcombine.high %v655, %v659
        %v669 = vunpack.c.l.s4 1983009808
        %v670 = vunpack.c.0.s8 %v669
        %v671 = vlaneseq
        %v672 = vshrl.u32 %v671, 7
        %v673 = vsub.s32 %v670, %v672
        %v674 = vrot.slane %v666, %v673
        %v676 = vunpack.c.l.s4 1983009808
        %v677 = vunpack.c.0.s8 %v676
        %v678 = vlaneseq
        %v679 = vshrl.u32 %v678, 7
        %v680 = vsub.s32 %v677, %v679
        %v681 = vrot.slane %v667, %v680
        %v682 = vcombine.low %v657, %v661
        %v683 = vcombine.high %v657, %v661
        %v685 = vunpack.c.l.s4 1983009808
        %v686 = vunpack.c.0.s8 %v685
        %v687 = vlaneseq
        %v688 = vshrl.u32 %v687, 7
        %v689 = vsub.s32 %v686, %v688
        %v690 = vrot.slane %v682, %v689
        %v692 = vunpack.c.l.s4 1983009808
        %v693 = vunpack.c.0.s8 %v692
        %v694 = vlaneseq
        %v695 = vshrl.u32 %v694, 7
        %v696 = vsub.s32 %v693, %v695
        %v697 = vrot.slane %v683, %v696
        %v698 = vcombine.low %v674, %v690
        %v699 = vcombine.high %v674, %v690
        %v701 = vunpack.c.l.s4 1934713408
        %v702 = vunpack.c.0.s8 %v701
        %v703 = vlaneseq
        %v704 = vshrl.u32 %v703, 7
        %v705 = vsub.s32 %v702, %v704
        %v706 = vrot.slane %v698, %v705
        %v708 = vunpack.c.l.s4 1934713408
        %v709 = vunpack.c.0.s8 %v708
        %v710 = vlaneseq
        %v711 = vshrl.u32 %v710, 7
        %v712 = vsub.s32 %v709, %v711
        %v713 = vrot.slane %v699, %v712
        %v714 = vcombine.low %v681, %v697
        %v715 = vcombine.high %v681, %v697
        %v717 = vunpack.c.l.s4 1934713408
        %v718 = vunpack.c.0.s8 %v717
        %v719 = vlaneseq
        %v720 = vshrl.u32 %v719, 7
        %v721 = vsub.s32 %v718, %v720
        %v722 = vrot.slane %v714, %v721
        %v724 = vunpack.c.l.s4 1934713408
        %v725 = vunpack.c.0.s8 %v724
        %v726 = vlaneseq
        %v727 = vshrl.u32 %v726, 7
        %v728 = vsub.s32 %v725, %v727
        %v729 = vrot.slane %v715, %v728
        %v730 = vcombine.high %v706, 0.0
        %v731 = vcombine.high %v713, 0.0
        %v732 = vcombine.high %v722, 0.0
        %v733 = vcombine.high %v729, 0.0
        %v734 = vcombine.low %v706, %v713
        %v736 = vunpack.c.l.s4 1983009808
        %v737 = vunpack.c.0.s8 %v736
        %v738 = vlaneseq
        %v739 = vshrl.u32 %v738, 7
        %v740 = vsub.s32 %v737, %v739
        %v741 = vrot.slane %v734, %v740
        %v742 = vcombine.low %v730, %v731
        %v744 = vunpack.c.l.s4 1983009808
        %v745 = vunpack.c.0.s8 %v744
        %v746 = vlaneseq
        %v747 = vshrl.u32 %v746, 7
        %v748 = vsub.s32 %v745, %v747
        %v749 = vrot.slane %v742, %v748
        %v750 = vcombine.low %v722, %v729
        %v752 = vunpack.c.l.s4 1983009808
        %v753 = vunpack.c.0.s8 %v752
        %v754 = vlaneseq
        %v755 = vshrl.u32 %v754, 7
        %v756 = vsub.s32 %v753, %v755
        %v757 = vrot.slane %v750, %v756
        %v758 = vcombine.low %v732, %v733
        %v760 = vunpack.c.l.s4 1983009808
        %v761 = vunpack.c.0.s8 %v760
        %v762 = vlaneseq
        %v763 = vshrl.u32 %v762, 7
        %v764 = vsub.s32 %v761, %v763
        %v765 = vrot.slane %v758, %v764
        %v766 = vcombine.low %v741, %v749
        %v767 = vcombine.high %v741, %v749
        %v769 = vunpack.c.l.s4 1934713408
        %v770 = vunpack.c.0.s8 %v769
        %v771 = vlaneseq
        %v772 = vshrl.u32 %v771, 7
        %v773 = vsub.s32 %v770, %v772
        %v774 = vrot.slane %v766, %v773
        %v776 = vunpack.c.l.s4 1934713408
        %v777 = vunpack.c.0.s8 %v776
        %v778 = vlaneseq
        %v779 = vshrl.u32 %v778, 7
        %v780 = vsub.s32 %v777, %v779
        %v781 = vrot.slane %v767, %v780
        %v782 = vcombine.low %v757, %v765
        %v783 = vcombine.high %v757, %v765
        %v785 = vunpack.c.l.s4 1934713408
        %v786 = vunpack.c.0.s8 %v785
        %v787 = vlaneseq
        %v788 = vshrl.u32 %v787, 7
        %v789 = vsub.s32 %v786, %v788
        %v790 = vrot.slane %v782, %v789
        %v792 = vunpack.c.l.s4 1934713408
        %v793 = vunpack.c.0.s8 %v792
        %v794 = vlaneseq
        %v795 = vshrl.u32 %v794, 7
        %v796 = vsub.s32 %v793, %v795
        %v797 = vrot.slane %v783, %v796
        %v798 = vcombine.low %v774, %v790
        %v799 = vcombine.high %v774, %v790
        %v800 = vcombine.low %v781, %v797
        %v801 = vcombine.high %v781, %v797
        %v802 = vpack.c.bf16 %v798, %v798
        %v803 = vpack.c.bf16 %v799, %v799
        %v804 = vpack.c.bf16 %v800, %v800
        %v805 = vpack.c.bf16 %v801, %v801
        %806 = vst.msk [vmem:[%s347] sm:$0xf] %vm599, %v802
        %807 = vst.msk [vmem:[%s347 + $0x4] sm:$0xf] %vm599, %v803
        %808 = vst.msk [vmem:[%s347 + $0x8] sm:$0xf] %vm599, %v804
        %809 = vst.msk [vmem:[%s347 + $0xc] sm:$0xf] %vm599, %v805
        %s810 = sand.u32 %s163, 1
        %s811 = scalar_lea.sflag [#allocation4], %s810
        %s812 = sand.u32 %s163, 1
        %s813 = smul.addr %s812, 16
        %s814 = scalar_lea.vmem [#allocation7], %s813
        %s815 = sand.u32 %s29, 1
        %s816 = scalar_lea.sflag [#allocation9], %s815
        %s817 = sand.u32 %s191, 1
        %s818 = smul.addr %s817, 16
        %s819 = scalar_lea.vmem [#allocation8], %s818
        %s820 = sand.u32 %s29, 1
        %s821 = scalar_lea.sflag [#allocation9], %s820
        %s822 = sand.u32 %s219, 1
        %s823 = smul.addr %s822, 16
        %s824 = scalar_lea.vmem [#allocation10], %s823
        // Predicated region
        $region49: #{tpu_custom_call.1} parent=39 // pred_check
          %p825 = pneg %p173
        $region50: #{tpu_custom_call.1} parent=39 // pred_check_branch
          %827 = sbr.rel (%p825) target = $region52
        $region51: #{tpu_custom_call.1} parent=39 // pred_region
          %s829 = ssub.s32 256, 256
          %830 = vsyncadd %s811, %s829
          %s831 = smul.addr %s33, 4
          %s832 = sadd.s32 %s34, %s831
          %s833 = smul.addr %s832, 64
          %s834 = scalar_lea.hbm %s5, %s833
          %s835 = sshll.u32 %s814, 4
          %s836 = int_to_ptr.vmem [resolvable:$true] %s835
          %841 = dma.vmem_to_hbm [thread:$0]  %s836, 256, %s834, %s811, 64, 64, 4
        $region52: #{tpu_custom_call.1} parent=39 // pred_fallthru
          _
        // Predicated region
        $region53: #{tpu_custom_call.1} parent=39 // pred_check
          %p842 = pneg %p201
        $region54: #{tpu_custom_call.1} parent=39 // pred_check_branch
          %844 = sbr.rel (%p842) target = $region56
        $region55: #{tpu_custom_call.1} parent=39 // pred_region
          %s846 = ssub.s32 256, 256
          %847 = vsyncadd %s816, %s846
          %s848 = smul.addr %s33, 4
          %s849 = sadd.s32 %s34, %s848
          %s850 = smul.addr %s849, 64
          %s851 = scalar_lea.hbm %s6, %s850
          %s852 = sshll.u32 %s819, 4
          %s853 = int_to_ptr.vmem [resolvable:$true] %s852
          %858 = dma.vmem_to_hbm [thread:$0]  %s853, 256, %s851, %s816, 64, 64, 4
        $region56: #{tpu_custom_call.1} parent=39 // pred_fallthru
          _
        // Predicated region
        $region57: #{tpu_custom_call.1} parent=39 // pred_check
          %p859 = pneg %p229
        $region58: #{tpu_custom_call.1} parent=39 // pred_check_branch
          %861 = sbr.rel (%p859) target = $region60
        $region59: #{tpu_custom_call.1} parent=39 // pred_region
          %s863 = ssub.s32 256, 256
          %864 = vsyncadd %s821, %s863
          %s865 = smul.addr %s33, 4
          %s866 = sadd.s32 %s34, %s865
          %s867 = smul.addr %s866, 64
          %s868 = scalar_lea.hbm %s7, %s867
          %s869 = sshll.u32 %s824, 4
          %s870 = int_to_ptr.vmem [resolvable:$true] %s869
          %875 = dma.vmem_to_hbm [thread:$0]  %s870, 256, %s868, %s821, 64, 64, 4
        $region60: #{tpu_custom_call.1} parent=39 // pred_fallthru
          _
      $region40: #{tpu_custom_call.1} parent=5 // pred_fallthru
        _
      %p876 = scmp.le.s32.totalorder 2, %s24
      // Predicated region
      $region61: #{tpu_custom_call.1} parent=5 // pred_check
        %p877 = pneg %p876
      $region62: #{tpu_custom_call.1} parent=5 // pred_check_branch
        %879 = sbr.rel (%p877) target = $region64
      $region63: #{tpu_custom_call.1} parent=5 // pred_region
        %s880 = ssub.s32 %s24, 2
        // Predicated region
        $region65: #{tpu_custom_call.1} parent=63 // pred_check
          %p881 = pneg %p179
        $region66: #{tpu_custom_call.1} parent=63 // pred_check_branch
          %883 = sbr.rel (%p881) target = $region68
        $region67: #{tpu_custom_call.1} parent=63 // pred_region
          %s884 = sand.u32 %s164, 1
          %s885 = scalar_lea.sflag [#allocation4], %s884
          %s886 = sand.u32 %s164, 1
          %s887 = smul.addr %s886, 16
          %s888 = scalar_lea.vmem [#allocation7], %s887
          %889 = dma.done %s885, 256
        $region68: #{tpu_custom_call.1} parent=63 // pred_fallthru
          _
        // Predicated region
        $region69: #{tpu_custom_call.1} parent=63 // pred_check
          %p890 = pneg %p207
        $region70: #{tpu_custom_call.1} parent=63 // pred_check_branch
          %892 = sbr.rel (%p890) target = $region72
        $region71: #{tpu_custom_call.1} parent=63 // pred_region
          %s893 = sand.u32 %s30, 1
          %s894 = scalar_lea.sflag [#allocation9], %s893
          %s895 = sand.u32 %s192, 1
          %s896 = smul.addr %s895, 16
          %s897 = scalar_lea.vmem [#allocation8], %s896
          %898 = dma.done %s894, 256
        $region72: #{tpu_custom_call.1} parent=63 // pred_fallthru
          _
        // Predicated region
        $region73: #{tpu_custom_call.1} parent=63 // pred_check
          %p899 = pneg %p235
        $region74: #{tpu_custom_call.1} parent=63 // pred_check_branch
          %901 = sbr.rel (%p899) target = $region76
        $region75: #{tpu_custom_call.1} parent=63 // pred_region
          %s902 = sand.u32 %s30, 1
          %s903 = scalar_lea.sflag [#allocation9], %s902
          %s904 = sand.u32 %s220, 1
          %s905 = smul.addr %s904, 16
          %s906 = scalar_lea.vmem [#allocation10], %s905
          %907 = dma.done %s903, 256
        $region76: #{tpu_custom_call.1} parent=63 // pred_fallthru
          _
      $region64: #{tpu_custom_call.1} parent=5 // pred_fallthru
        _
    $region6: #{tpu_custom_call.1} parent=1 // loop_footer
      %s28 = sadd.s32 1, %s24
    $region7: #{tpu_custom_call.1} parent=1 // loop_footer_branch
      %23 = sbr.rel target = $region3
    $region8: #{tpu_custom_call.1} parent=1 // loop_exit
      _
    %908 = vsyncpa [#allocation3], 1
    %s909 = scalar_lea.sflag [#allocation3], 1
    %910 = vsyncpa %s909, 1
    %911 = vsyncpa [#allocation6], 1
    %912 = vsyncpa [#allocation4], 1
    %s913 = scalar_lea.sflag [#allocation4], 1
    %914 = vsyncpa %s913, 1
    %915 = vsyncpa [#allocation9], 1
    %s916 = scalar_lea.sflag [#allocation9], 1
    %917 = vsyncpa %s916, 1

// kernel: tpu_custom_call.1
$region0: #{tpu_custom_call.1}
  #allocation0 [shape = 'u32[]', space=smem, size = 0x4, offset = 0x4, fixed_abs, tag = 'smem constant byte address 0x4 - core index']
  #allocation1 [shape = 'u32[144,128]{1,0:T(1,128)}', space=vmem, size = 0x12000, scoped, tag = 'internal scratch']
  %s0 = inlined_call_operand.hbm [shape: f32[2,8,32], index: 0, kind: input, shape index: {}]
  %s1 = inlined_call_operand.vmem [shape: f32[1,32], index: 1, kind: input, shape index: {}]
  %s2 = inlined_call_operand.vmem [shape: f32[1,32], index: 2, kind: input, shape index: {}]
  %s3 = inlined_call_operand.hbm [shape: bf16[32,96], index: 3, kind: input, shape index: {}]
  %s4 = inlined_call_operand.vmem [shape: f32[1,96], index: 4, kind: input, shape index: {}]
  %s5 = inlined_call_operand.hbm [shape: bf16[2,4,8,8], index: 5, kind: output, shape index: {0}]
  %s6 = inlined_call_operand.hbm [shape: bf16[2,4,8,8], index: 6, kind: output, shape index: {1}]
  %s7 = inlined_call_operand.hbm [shape: bf16[2,4,8,8], index: 7, kind: output, shape index: {2}]
  %8 = xla_tuple %s5, %s6, %s7
  %s9 = sld [smem:[#allocation0]]
  $region77: #{tpu_custom_call.1} parent=0
    _
  %s11 = ssub.s32 1, %s9
  %s12 = scalar_select 0, %s11, %s9
  $region1: #{tpu_custom_call.1} parent=0
    #allocation2 [shape = 'u8[8192]{0}', space=vmem, size = 0x2000, scoped, tag = 'input window, operand 0']
    #allocation3 [shape = 's32[2]{0}', space=sflag, size = 0x8, scoped, tag = 'scoped memory for tpu_custom_call.1']
    #allocation4 [shape = 's32[2]{0}', space=sflag, size = 0x8, scoped, tag = 'scoped memory for tpu_custom_call.1']
    #allocation5 [shape = 'u8[8192]{0}', space=vmem, size = 0x2000, scoped, tag = 'input window, operand 3, single buffered']
    #allocation6 [shape = 's32[1]{0}', space=sflag, size = 0x4, scoped, tag = 'scoped memory for tpu_custom_call.1']
    #allocation7 [shape = 'u8[16384]{0}', space=vmem, size = 0x4000, scoped, tag = 'output window, operand 0']
    #allocation8 [shape = 'u8[16384]{0}', space=vmem, size = 0x4000, scoped, tag = 'output window, operand 1']
    #allocation9 [shape = 's32[2]{0}', space=sflag, size = 0x8, scoped, tag = 'scoped memory for tpu_custom_call.1']
    #allocation10 [shape = 'u8[16384]{0}', space=vmem, size = 0x4000, scoped, tag = 'output window, operand 2']
    %13 = vsyncpa [#allocation3], 0
    %s14 = scalar_lea.sflag [#allocation3], 1
    %15 = vsyncpa %s14, 0
    %16 = vsyncpa [#allocation6], 0
    %17 = vsyncpa [#allocation4], 0
    %s18 = scalar_lea.sflag [#allocation4], 1
    %19 = vsyncpa %s18, 0
    %20 = vsyncpa [#allocation9], 0
    %s21 = scalar_lea.sflag [#allocation9], 1
    %22 = vsyncpa %s21, 0
    loop: start=0, step=1, limit=4
    $region2: #{tpu_custom_call.1} parent=1 // loop_pre_header
      _
    $region3: #{tpu_custom_call.1} parent=1 // loop_header
      %s24 = sphi 0, %s28
      %p25 = scmp.ge.s32.totalorder %s24, 4
      %s31 = sphi 0, %s43
      %s32 = sphi 0, %s39
      %s33 = sphi 0, %s31
      %s34 = sphi 0, %s32
      %s35 = sphi 0, %s33
      %s36 = sphi 0, %s34
      %s48 = sphi 0, %s50
      %s51 = sphi 0, %s48
      %s52 = sphi 0, %s51
      %s68 = sphi 0, %s52
      %s72 = sphi 0, %s72
      %s74 = sphi 0, %s72
      %s75 = sphi 0, %s74
      %s89 = sphi 0, %s75
      %s93 = sphi 0, %s93
      %s95 = sphi 0, %s93
      %s96 = sphi 0, %s95
      %s110 = sphi 0, %s96
      %s114 = sphi 0, %s114
      %s116 = sphi 0, %s114
      %s117 = sphi 0, %s116
      %s131 = sphi 0, %s117
      %s135 = sphi 0, %s135
      %s137 = sphi 0, %s135
      %s138 = sphi 0, %s137
      %s152 = sphi 0, %s138
      %s160 = sphi 0, %s162
      %s163 = sphi 0, %s160
      %s164 = sphi 0, %s163
      %s180 = sphi 0, %s164
      %s188 = sphi 0, %s190
      %s191 = sphi 0, %s188
      %s192 = sphi 0, %s191
      %s208 = sphi 0, %s192
      %s216 = sphi 0, %s218
      %s219 = sphi 0, %s216
      %s220 = sphi 0, %s219
      %s236 = sphi 0, %s220
    $region4: #{tpu_custom_call.1} parent=1 // loop_header_branch
      %27 = sbr.rel (%p25) target = $region8
    $region5: #{tpu_custom_call.1} parent=1 // loop_body
      %s29 = ssub.s32 %s24, 1
      %s30 = ssub.s32 %s24, 2
      %s37 = sadd.s32 1, %s32
      %p38 = scmp.ge.s32.totalorder %s37, 1
      %s39 = scalar_select %p38, 0, %s37
      %s40 = sadd.s32 1, %s31
      %s41 = scalar_select %p38, %s40, %s31
      %p42 = scmp.ge.s32.totalorder %s41, 2
      %s43 = scalar_select %p42, 0, %s41
      %s44 = ssub.s32 %s31, %s43
      %s45 = ssub.s32 %s32, %s39
      %s46 = sor.u32 %s44, %s45
      %p47 = scmp.eq.s32.totalorder %s46, 0
      %s49 = sadd.s32 %s48, 1
      %s50 = scalar_select %p47, %s48, %s49
      %p53 = pneg %p47
      %p54 = scmp.eq.s32.totalorder %s24, 1
      %p55 = por %p53, %p54
      %p56 = scmp.ne.s32.totalorder %s48, %s51
      %p57 = scmp.eq.s32.totalorder %s24, 0
      %p58 = por %p56, %p57
      %p59 = scmp.ne.s32.totalorder %s48, %s51
      %p60 = scmp.eq.s32.totalorder %s29, 1
      %p61 = por %p59, %p60
      %p62 = scmp.ne.s32.totalorder %s51, %s52
      %p63 = scmp.eq.s32.totalorder %s29, 0
      %p64 = por %p62, %p63
      %p65 = scmp.ne.s32.totalorder %s51, %s52
      %p66 = scmp.eq.s32.totalorder %s30, 1
      %p67 = por %p65, %p66
      %p69 = scmp.ne.s32.totalorder %s52, %s68
      %p70 = scmp.eq.s32.totalorder %s30, 0
      %p71 = por %p69, %p70
      %s73 = sadd.s32 %s72, 1
      %p76 = scmp.eq.s32.totalorder %s24, 1
      %p77 = scmp.ne.s32.totalorder %s72, %s74
      %p78 = scmp.eq.s32.totalorder %s24, 0
      %p79 = por %p77, %p78
      %p80 = scmp.ne.s32.totalorder %s72, %s74
      %p81 = scmp.eq.s32.totalorder %s29, 1
      %p82 = por %p80, %p81
      %p83 = scmp.ne.s32.totalorder %s74, %s75
      %p84 = scmp.eq.s32.totalorder %s29, 0
      %p85 = por %p83, %p84
      %p86 = scmp.ne.s32.totalorder %s74, %s75
      %p87 = scmp.eq.s32.totalorder %s30, 1
      %p88 = por %p86, %p87
      %p90 = scmp.ne.s32.totalorder %s75, %s89
      %p91 = scmp.eq.s32.totalorder %s30, 0
      %p92 = por %p90, %p91
      %s94 = sadd.s32 %s93, 1
      %p97 = scmp.eq.s32.totalorder %s24, 1
      %p98 = scmp.ne.s32.totalorder %s93, %s95
      %p99 = scmp.eq.s32.totalorder %s24, 0
      %p100 = por %p98, %p99
      %p101 = scmp.ne.s32.totalorder %s93, %s95
      %p102 = scmp.eq.s32.totalorder %s29, 1
      %p103 = por %p101, %p102
      %p104 = scmp.ne.s32.totalorder %s95, %s96
      %p105 = scmp.eq.s32.totalorder %s29, 0
      %p106 = por %p104, %p105
      %p107 = scmp.ne.s32.totalorder %s95, %s96
      %p108 = scmp.eq.s32.totalorder %s30, 1
      %p109 = por %p107, %p108
      %p111 = scmp.ne.s32.totalorder %s96, %s110
      %p112 = scmp.eq.s32.totalorder %s30, 0
      %p113 = por %p111, %p112
      %s115 = sadd.s32 %s114, 1
      %p118 = scmp.eq.s32.totalorder %s24, 1
      %p119 = scmp.ne.s32.totalorder %s114, %s116
      %p120 = scmp.eq.s32.totalorder %s24, 0
      %p121 = por %p119, %p120
      %p122 = scmp.ne.s32.totalorder %s114, %s116
      %p123 = scmp.eq.s32.totalorder %s29, 1
      %p124 = por %p122, %p123
      %p125 = scmp.ne.s32.totalorder %s116, %s117
      %p126 = scmp.eq.s32.totalorder %s29, 0
      %p127 = por %p125, %p126
      %p128 = scmp.ne.s32.totalorder %s116, %s117
      %p129 = scmp.eq.s32.totalorder %s30, 1
      %p130 = por %p128, %p129
      %p132 = scmp.ne.s32.totalorder %s117, %s131
      %p133 = scmp.eq.s32.totalorder %s30, 0
      %p134 = por %p132, %p133
      %s136 = sadd.s32 %s135, 1
      %p139 = scmp.eq.s32.totalorder %s24, 1
      %p140 = scmp.ne.s32.totalorder %s135, %s137
      %p141 = scmp.eq.s32.totalorder %s24, 0
      %p142 = por %p140, %p141
      %p143 = scmp.ne.s32.totalorder %s135, %s137
      %p144 = scmp.eq.s32.totalorder %s29, 1
      %p145 = por %p143, %p144
      %p146 = scmp.ne.s32.totalorder %s137, %s138
      %p147 = scmp.eq.s32.totalorder %s29, 0
      %p148 = por %p146, %p147
      %p149 = scmp.ne.s32.totalorder %s137, %s138
      %p150 = scmp.eq.s32.totalorder %s30, 1
      %p151 = por %p149, %p150
      %p153 = scmp.ne.s32.totalorder %s138, %s152
      %p154 = scmp.eq.s32.totalorder %s30, 0
      %p155 = por %p153, %p154
      %s156 = ssub.s32 %s31, %s43
      %s157 = ssub.s32 %s32, %s39
      %s158 = sor.u32 %s156, %s157
      %p159 = scmp.eq.s32.totalorder %s158, 0
      %s161 = sadd.s32 %s160, 1
      %s162 = scalar_select %p159, %s160, %s161
      %p165 = pneg %p159
      %p166 = scmp.eq.s32.totalorder %s24, 1
      %p167 = por %p165, %p166
      %p168 = scmp.ne.s32.totalorder %s160, %s163
      %p169 = scmp.eq.s32.totalorder %s24, 0
      %p170 = por %p168, %p169
      %p171 = scmp.ne.s32.totalorder %s160, %s163
      %p172 = scmp.eq.s32.totalorder %s29, 1
      %p173 = por %p171, %p172
      %p174 = scmp.ne.s32.totalorder %s163, %s164
      %p175 = scmp.eq.s32.totalorder %s29, 0
      %p176 = por %p174, %p175
      %p177 = scmp.ne.s32.totalorder %s163, %s164
      %p178 = scmp.eq.s32.totalorder %s30, 1
      %p179 = por %p177, %p178
      %p181 = scmp.ne.s32.totalorder %s164, %s180
      %p182 = scmp.eq.s32.totalorder %s30, 0
      %p183 = por %p181, %p182
      %s184 = ssub.s32 %s31, %s43
      %s185 = ssub.s32 %s32, %s39
      %s186 = sor.u32 %s184, %s185
      %p187 = scmp.eq.s32.totalorder %s186, 0
      %s189 = sadd.s32 %s188, 1
      %s190 = scalar_select %p187, %s188, %s189
      %p193 = pneg %p187
      %p194 = scmp.eq.s32.totalorder %s24, 1
      %p195 = por %p193, %p194
      %p196 = scmp.ne.s32.totalorder %s188, %s191
      %p197 = scmp.eq.s32.totalorder %s24, 0
      %p198 = por %p196, %p197
      %p199 = scmp.ne.s32.totalorder %s188, %s191
      %p200 = scmp.eq.s32.totalorder %s29, 1
      %p201 = por %p199, %p200
      %p202 = scmp.ne.s32.totalorder %s191, %s192
      %p203 = scmp.eq.s32.totalorder %s29, 0
      %p204 = por %p202, %p203
      %p205 = scmp.ne.s32.totalorder %s191, %s192
      %p206 = scmp.eq.s32.totalorder %s30, 1
      %p207 = por %p205, %p206
      %p209 = scmp.ne.s32.totalorder %s192, %s208
      %p210 = scmp.eq.s32.totalorder %s30, 0
      %p211 = por %p209, %p210
      %s212 = ssub.s32 %s31, %s43
      %s213 = ssub.s32 %s32, %s39
      %s214 = sor.u32 %s212, %s213
      %p215 = scmp.eq.s32.totalorder %s214, 0
      %s217 = sadd.s32 %s216, 1
      %s218 = scalar_select %p215, %s216, %s217
      %p221 = pneg %p215
      %p222 = scmp.eq.s32.totalorder %s24, 1
      %p223 = por %p221, %p222
      %p224 = scmp.ne.s32.totalorder %s216, %s219
      %p225 = scmp.eq.s32.totalorder %s24, 0
      %p226 = por %p224, %p225
      %p227 = scmp.ne.s32.totalorder %s216, %s219
      %p228 = scmp.eq.s32.totalorder %s29, 1
      %p229 = por %p227, %p228
      %p230 = scmp.ne.s32.totalorder %s219, %s220
      %p231 = scmp.eq.s32.totalorder %s29, 0
      %p232 = por %p230, %p231
      %p233 = scmp.ne.s32.totalorder %s219, %s220
      %p234 = scmp.eq.s32.totalorder %s30, 1
      %p235 = por %p233, %p234
      %p237 = scmp.ne.s32.totalorder %s220, %s236
      %p238 = scmp.eq.s32.totalorder %s30, 0
      %p239 = por %p237, %p238
      %p240 = scmp.le.s32.totalorder 1, %s24
      %p241 = scmp.lt.s32.totalorder %s24, 3
      %p242 = pnand %p240, %p241
      %p243 = pneg %p242
      // Predicated region
      $region9: #{tpu_custom_call.1} parent=5 // pred_check
        _
      $region10: #{tpu_custom_call.1} parent=5 // pred_check_branch
        %245 = sbr.rel (%p242) target = $region12
      $region11: #{tpu_custom_call.1} parent=5 // pred_region
        %s246 = ssub.s32 %s24, 1
        // Predicated region
        $region13: #{tpu_custom_call.1} parent=11 // pred_check
          %p247 = pneg %p85
        $region14: #{tpu_custom_call.1} parent=11 // pred_check_branch
          %249 = sbr.rel (%p247) target = $region16
        $region15: #{tpu_custom_call.1} parent=11 // pred_region
          _
        $region16: #{tpu_custom_call.1} parent=11 // pred_fallthru
          _
        // Predicated region
        $region17: #{tpu_custom_call.1} parent=11 // pred_check
          %p250 = pneg %p106
        $region18: #{tpu_custom_call.1} parent=11 // pred_check_branch
          %252 = sbr.rel (%p250) target = $region20
        $region19: #{tpu_custom_call.1} parent=11 // pred_region
          _
        $region20: #{tpu_custom_call.1} parent=11 // pred_fallthru
          _
        // Predicated region
        $region21: #{tpu_custom_call.1} parent=11 // pred_check
          %p253 = pneg %p127
        $region22: #{tpu_custom_call.1} parent=11 // pred_check_branch
          %255 = sbr.rel (%p253) target = $region24
        $region23: #{tpu_custom_call.1} parent=11 // pred_region
          %s257 = ssub.s32 256, 256
          %258 = vsyncadd [#allocation6], %s257
          %s259 = sshll.u32 [#allocation5], 4
          %s260 = int_to_ptr.vmem [resolvable:$true] %s259
          %265 = dma.hbm_to_vmem [thread:$0]  %s3, 256, %s260, [#allocation6], 64, 64, 4
        $region24: #{tpu_custom_call.1} parent=11 // pred_fallthru
          _
        // Predicated region
        $region25: #{tpu_custom_call.1} parent=11 // pred_check
          %p266 = pneg %p148
        $region26: #{tpu_custom_call.1} parent=11 // pred_check_branch
          %268 = sbr.rel (%p266) target = $region28
        $region27: #{tpu_custom_call.1} parent=11 // pred_region
          _
        $region28: #{tpu_custom_call.1} parent=11 // pred_fallthru
          _
      $region12: #{tpu_custom_call.1} parent=5 // pred_fallthru
        _
      %p269 = scmp.lt.s32.totalorder %s24, 2
      // Predicated region
      $region29: #{tpu_custom_call.1} parent=5 // pred_check
        %p270 = pneg %p269
      $region30: #{tpu_custom_call.1} parent=5 // pred_check_branch
        %272 = sbr.rel (%p270) target = $region32
      $region31: #{tpu_custom_call.1} parent=5 // pred_region
        // Predicated region
        $region33: #{tpu_custom_call.1} parent=31 // pred_check
          %p273 = pneg %p58
        $region34: #{tpu_custom_call.1} parent=31 // pred_check_branch
          %275 = sbr.rel (%p273) target = $region36
        $region35: #{tpu_custom_call.1} parent=31 // pred_region
          %s276 = sand.u32 %s48, 1
          %s277 = scalar_lea.sflag [#allocation3], %s276
          %s278 = sand.u32 %s48, 1
          %s279 = smul.addr %s278, 8
          %s280 = scalar_lea.vmem [#allocation2], %s279
          %s282 = ssub.s32 128, 128
          %283 = vsyncadd %s277, %s282
          %s284 = sadd.s32 %s32, %s31
          %s285 = smul.addr %s284, 128
          %s286 = scalar_lea.hbm %s0, %s285
          %s288 = sshll.u32 %s280, 4
          %s289 = int_to_ptr.vmem [resolvable:$true] %s288
          %291 = dma.hbm_to_vmem [thread:$0]  %s286, 128, %s289, %s277
        $region36: #{tpu_custom_call.1} parent=31 // pred_fallthru
          _
      $region32: #{tpu_custom_call.1} parent=5 // pred_fallthru
        _
      %p292 = scmp.le.s32.totalorder 1, %s24
      %p293 = scmp.lt.s32.totalorder %s24, 3
      %p294 = pnand %p292, %p293
      %p295 = pneg %p294
      // Predicated region
      $region37: #{tpu_custom_call.1} parent=5 // pred_check
        _
      $region38: #{tpu_custom_call.1} parent=5 // pred_check_branch
        %297 = sbr.rel (%p294) target = $region40
      $region39: #{tpu_custom_call.1} parent=5 // pred_region
        %s298 = ssub.s32 %s24, 1
        %s299 = sand.u32 %s51, 1
        %s300 = scalar_lea.sflag [#allocation3], %s299
        %s301 = sand.u32 %s51, 1
        %s302 = smul.addr %s301, 8
        %s303 = scalar_lea.vmem [#allocation2], %s302
        // Predicated region
        $region41: #{tpu_custom_call.1} parent=39 // pred_check
          %p304 = pneg %p64
        $region42: #{tpu_custom_call.1} parent=39 // pred_check_branch
          %306 = sbr.rel (%p304) target = $region44
        $region43: #{tpu_custom_call.1} parent=39 // pred_region
          %307 = dma.done %s300, 128
        $region44: #{tpu_custom_call.1} parent=39 // pred_fallthru
          _
        // Predicated region
        $region45: #{tpu_custom_call.1} parent=39 // pred_check
          %p308 = pneg %p127
        $region46: #{tpu_custom_call.1} parent=39 // pred_check_branch
          %310 = sbr.rel (%p308) target = $region48
        $region47: #{tpu_custom_call.1} parent=39 // pred_region
          %311 = dma.done [#allocation6], 256
        $region48: #{tpu_custom_call.1} parent=39 // pred_fallthru
          _
        %s312 = sand.u32 %s51, 1
        %s313 = scalar_lea.sflag [#allocation3], %s312
        %s314 = sand.u32 %s51, 1
        %s315 = smul.addr %s314, 8
        %s316 = scalar_lea.vmem [#allocation2], %s315
        %p317 = pneg %p64
        %p318 = pneg %p61
        %p319 = pneg %p85
        %p320 = pneg %p82
        %p321 = pneg %p106
        %p322 = pneg %p103
        %p323 = pneg %p127
        %p324 = pneg %p124
        %p325 = pneg %p148
        %p326 = pneg %p145
        %p327 = pneg %p176
        %p328 = pneg %p173
        %s329 = sand.u32 %s163, 1
        %s330 = scalar_lea.sflag [#allocation4], %s329
        %s331 = sand.u32 %s163, 1
        %s332 = smul.addr %s331, 16
        %s333 = scalar_lea.vmem [#allocation7], %s332
        %p334 = pneg %p204
        %p335 = pneg %p201
        %s336 = sand.u32 %s29, 1
        %s337 = scalar_lea.sflag [#allocation9], %s336
        %s338 = sand.u32 %s191, 1
        %s339 = smul.addr %s338, 16
        %s340 = scalar_lea.vmem [#allocation8], %s339
        %p341 = pneg %p232
        %p342 = pneg %p229
        %s343 = sand.u32 %s29, 1
        %s344 = scalar_lea.sflag [#allocation9], %s343
        %s345 = sand.u32 %s219, 1
        %s346 = smul.addr %s345, 16
        %s347 = scalar_lea.vmem [#allocation10], %s346
        %v349 = vld [vmem:[%s303] sm:$0xff]
        %vm350 = vcmask 261120
        %v351 = vsel %vm350, %v349, 0.0
        %352 = vadd.xlane.f32.xlu0 %v351
        %v353 = vpop.xlane.xlu0 %352
        %v354 = vrcp.pop 32.0
        %v355 = vmul.f32 %v353, %v354
        %v356 = vsub.f32 %v349, %v355
        %v357 = vmul.f32 %v356, %v356
        %v358 = vsel %vm350, %v357, 0.0
        %359 = vadd.xlane.f32.xlu0 %v358
        %v360 = vpop.xlane.xlu0 %359
        %v361 = vmul.f32 %v360, %v354
        %v362 = vadd.f32 %v361, 1e-05
        %v363 = vrsqrt.pop %v362
        %v364 = vmul.f32 %v356, %v363
        %v365 = vld [vmem:[%s1] sm:$0x1]
        %v367 = vlaneseq
        %v368 = vshrl.u32 %v367, 7
        %v369 = vsub.s32 0, %v368
        %v370 = vrot.slane %v365, %v369
        %v372 = vmul.f32 %v364, %v370
        %v373 = vld [vmem:[%s2] sm:$0x1]
        %v375 = vlaneseq
        %v376 = vshrl.u32 %v375, 7
        %v377 = vsub.s32 0, %v376
        %v378 = vrot.slane %v373, %v377
        %v380 = vadd.f32 %v372, %v378
        %v381 = vpack.c.bf16 %v380, %v380
        %v382 = vld [vmem:[#allocation5] sm:$0xf]
        %v383 = vld [vmem:[#allocation5 + $0x4] sm:$0xf]
        %v384 = vld [vmem:[#allocation5 + $0x8] sm:$0xf]
        %v385 = vld [vmem:[#allocation5 + $0xc] sm:$0xf]
        %v386 = vld [vmem:[%s4] sm:$0x1]
        %v388 = vlaneseq
        %v389 = vshrl.u32 %v388, 7
        %v390 = vsub.s32 0, %v389
        %v391 = vrot.slane %v386, %v390
        %v397 = vunpack.c.l.b16 %v382
        %v398 = vunpack.c.l.b16 %v383
        %v399 = vunpack.c.l.b16 %v384
        %v400 = vunpack.c.l.b16 %v385
        %v401 = vpack.c.b16 %v398, %v397
        %v402 = vpack.c.b16 %v400, %v399
        %v406 = vsel %vm350, %v381, 0
        %408 = vmatprep.subr.bf16.mxu0 0
        %409 = vmatpush1.bf16.msra.mxu0 %v401
        %410 = vmatprep.subr.bf16.mxu0 0
        %411 = vmatpush1.bf16.msra.mxu0 %v402
        %412 = vmatprep.subr.bf16.mxu0 0
        %413 = vmatpush1.bf16.msra.mxu0 0
        %414 = vmatprep.subr.bf16.mxu0 0
        %415 = vmatpush1.bf16.msra.mxu0 0
        %416 = vmatprep.subr.bf16.mxu0 0
        %417 = vmatpush1.bf16.msra.mxu0 0
        %418 = vmatprep.subr.bf16.mxu0 0
        %419 = vmatpush1.bf16.msra.mxu0 0
        %420 = vmatprep.subr.bf16.mxu0 0
        %421 = vmatpush1.bf16.msra.mxu0 0
        %422 = vmatprep.subr.bf16.mxu0 0
        %423 = vmatpush1.bf16.msra.mxu0 0
        %424 = vmatprep.subr.bf16.mxu0 0
        %425 = vmatpush1.bf16.msra.mxu0 0
        %426 = vmatprep.subr.bf16.mxu0 0
        %427 = vmatpush1.bf16.msra.mxu0 0
        %428 = vmatprep.subr.bf16.mxu0 0
        %429 = vmatpush1.bf16.msra.mxu0 0
        %430 = vmatprep.subr.bf16.mxu0 0
        %431 = vmatpush1.bf16.msra.mxu0 0
        %432 = vmatprep.subr.bf16.mxu0 0
        %433 = vmatpush1.bf16.msra.mxu0 0
        %434 = vmatprep.subr.bf16.mxu0 0
        %435 = vmatpush1.bf16.msra.mxu0 0
        %436 = vmatprep.subr.bf16.mxu0 0
        %437 = vmatpush1.bf16.msra.mxu0 0
        %438 = vmatprep.subr.bf16.mxu0 0
        %439 = vmatpush1.bf16.msra.mxu0 0
        %440 = vmatprep.mubr.bf16.mxu0 0
        %441 = vmatmul.mubr.bf16.gmra.mrb[0].mxu0 %v406
        %v442 = vpop.f32.mrb[0].mxu0
        %v443 = vadd.f32 %v391, %v442
        %v444 = vpop.f32.mrb[0].mxu0
        %v445 = vpop.f32.mrb[0].mxu0
        %v446 = vpop.f32.mrb[0].mxu0
        %447 = vdwg.mxu0
        %v448 = vmul.f32 %v443, 0.35355338
        %450 = vrot.lane.b32.xlu0 %v448, 120
        %v451 = vpop.permute.xlu0 %450
        %453 = vrot.lane.b32.xlu0 %v448, 112
        %v454 = vpop.permute.xlu0 %453
        %456 = vrot.lane.b32.xlu0 %v448, 104
        %v457 = vpop.permute.xlu0 %456
        %v459 = vcombine.low %v448, %v454
        %v460 = vcombine.high %v448, %v454
        %v462 = vunpack.c.l.s4 1983009808
        %v463 = vunpack.c.0.s8 %v462
        %v464 = vlaneseq
        %v465 = vshrl.u32 %v464, 7
        %v466 = vsub.s32 %v463, %v465
        %v467 = vrot.slane %v459, %v466
        %v469 = vunpack.c.l.s4 1983009808
        %v470 = vunpack.c.0.s8 %v469
        %v471 = vlaneseq
        %v472 = vshrl.u32 %v471, 7
        %v473 = vsub.s32 %v470, %v472
        %v474 = vrot.slane %v460, %v473
        %v475 = vcombine.low %v451, %v457
        %v476 = vcombine.high %v451, %v457
        %v478 = vunpack.c.l.s4 1983009808
        %v479 = vunpack.c.0.s8 %v478
        %v480 = vlaneseq
        %v481 = vshrl.u32 %v480, 7
        %v482 = vsub.s32 %v479, %v481
        %v483 = vrot.slane %v475, %v482
        %v485 = vunpack.c.l.s4 1983009808
        %v486 = vunpack.c.0.s8 %v485
        %v487 = vlaneseq
        %v488 = vshrl.u32 %v487, 7
        %v489 = vsub.s32 %v486, %v488
        %v490 = vrot.slane %v476, %v489
        %v491 = vcombine.low %v467, %v483
        %v492 = vcombine.high %v467, %v483
        %v494 = vunpack.c.l.s4 1934713408
        %v495 = vunpack.c.0.s8 %v494
        %v496 = vlaneseq
        %v497 = vshrl.u32 %v496, 7
        %v498 = vsub.s32 %v495, %v497
        %v499 = vrot.slane %v491, %v498
        %v501 = vunpack.c.l.s4 1934713408
        %v502 = vunpack.c.0.s8 %v501
        %v503 = vlaneseq
        %v504 = vshrl.u32 %v503, 7
        %v505 = vsub.s32 %v502, %v504
        %v506 = vrot.slane %v492, %v505
        %v507 = vcombine.low %v474, %v490
        %v508 = vcombine.high %v474, %v490
        %v510 = vunpack.c.l.s4 1934713408
        %v511 = vunpack.c.0.s8 %v510
        %v512 = vlaneseq
        %v513 = vshrl.u32 %v512, 7
        %v514 = vsub.s32 %v511, %v513
        %v515 = vrot.slane %v507, %v514
        %v517 = vunpack.c.l.s4 1934713408
        %v518 = vunpack.c.0.s8 %v517
        %v519 = vlaneseq
        %v520 = vshrl.u32 %v519, 7
        %v521 = vsub.s32 %v518, %v520
        %v522 = vrot.slane %v508, %v521
        %v523 = vcombine.high %v499, 0.0
        %v524 = vcombine.high %v506, 0.0
        %v525 = vcombine.high %v515, 0.0
        %v526 = vcombine.high %v522, 0.0
        %v527 = vcombine.low %v499, %v506
        %v529 = vunpack.c.l.s4 1983009808
        %v530 = vunpack.c.0.s8 %v529
        %v531 = vlaneseq
        %v532 = vshrl.u32 %v531, 7
        %v533 = vsub.s32 %v530, %v532
        %v534 = vrot.slane %v527, %v533
        %v535 = vcombine.low %v523, %v524
        %v537 = vunpack.c.l.s4 1983009808
        %v538 = vunpack.c.0.s8 %v537
        %v539 = vlaneseq
        %v540 = vshrl.u32 %v539, 7
        %v541 = vsub.s32 %v538, %v540
        %v542 = vrot.slane %v535, %v541
        %v543 = vcombine.low %v515, %v522
        %v545 = vunpack.c.l.s4 1983009808
        %v546 = vunpack.c.0.s8 %v545
        %v547 = vlaneseq
        %v548 = vshrl.u32 %v547, 7
        %v549 = vsub.s32 %v546, %v548
        %v550 = vrot.slane %v543, %v549
        %v551 = vcombine.low %v525, %v526
        %v553 = vunpack.c.l.s4 1983009808
        %v554 = vunpack.c.0.s8 %v553
        %v555 = vlaneseq
        %v556 = vshrl.u32 %v555, 7
        %v557 = vsub.s32 %v554, %v556
        %v558 = vrot.slane %v551, %v557
        %v559 = vcombine.low %v534, %v542
        %v560 = vcombine.high %v534, %v542
        %v562 = vunpack.c.l.s4 1934713408
        %v563 = vunpack.c.0.s8 %v562
        %v564 = vlaneseq
        %v565 = vshrl.u32 %v564, 7
        %v566 = vsub.s32 %v563, %v565
        %v567 = vrot.slane %v559, %v566
        %v569 = vunpack.c.l.s4 1934713408
        %v570 = vunpack.c.0.s8 %v569
        %v571 = vlaneseq
        %v572 = vshrl.u32 %v571, 7
        %v573 = vsub.s32 %v570, %v572
        %v574 = vrot.slane %v560, %v573
        %v575 = vcombine.low %v550, %v558
        %v576 = vcombine.high %v550, %v558
        %v578 = vunpack.c.l.s4 1934713408
        %v579 = vunpack.c.0.s8 %v578
        %v580 = vlaneseq
        %v581 = vshrl.u32 %v580, 7
        %v582 = vsub.s32 %v579, %v581
        %v583 = vrot.slane %v575, %v582
        %v585 = vunpack.c.l.s4 1934713408
        %v586 = vunpack.c.0.s8 %v585
        %v587 = vlaneseq
        %v588 = vshrl.u32 %v587, 7
        %v589 = vsub.s32 %v586, %v588
        %v590 = vrot.slane %v576, %v589
        %v591 = vcombine.low %v567, %v583
        %v592 = vcombine.high %v567, %v583
        %v593 = vcombine.low %v574, %v590
        %v594 = vcombine.high %v574, %v590
        %v595 = vpack.c.bf16 %v591, %v591
        %v596 = vpack.c.bf16 %v592, %v592
        %v597 = vpack.c.bf16 %v593, %v593
        %v598 = vpack.c.bf16 %v594, %v594
        %vm599 = vcmask 60416
        %600 = vst.msk [vmem:[%s333] sm:$0xf] %vm599, %v595
        %601 = vst.msk [vmem:[%s333 + $0x4] sm:$0xf] %vm599, %v596
        %602 = vst.msk [vmem:[%s333 + $0x8] sm:$0xf] %vm599, %v597
        %603 = vst.msk [vmem:[%s333 + $0xc] sm:$0xf] %vm599, %v598
        %605 = vrot.lane.b32.xlu0 %v443, 96
        %v606 = vpop.permute.xlu0 %605
        %608 = vxpose.xlu0.b32.start [1/16] %v606, 128
        %609 = vxpose.xlu0.b32.cont [2/16] 0.0, 128
        %610 = vxpose.xlu0.b32.cont [3/16] 0.0, 128
        %611 = vxpose.xlu0.b32.cont [4/16] 0.0, 128
        %612 = vxpose.xlu0.b32.cont [5/16] 0.0, 128
        %613 = vxpose.xlu0.b32.cont [6/16] 0.0, 128
        %614 = vxpose.xlu0.b32.cont [7/16] 0.0, 128
        %615 = vxpose.xlu0.b32.cont [8/16] 0.0, 128
        %616 = vxpose.xlu0.b32.cont [9/16] 0.0, 128
        %617 = vxpose.xlu0.b32.cont [10/16] 0.0, 128
        %618 = vxpose.xlu0.b32.cont [11/16] 0.0, 128
        %619 = vxpose.xlu0.b32.cont [12/16] 0.0, 128
        %620 = vxpose.xlu0.b32.cont [13/16] 0.0, 128
        %621 = vxpose.xlu0.b32.cont [14/16] 0.0, 128
        %622 = vxpose.xlu0.b32.cont [15/16] 0.0, 128
        %623 = vxpose.xlu0.b32.end [16/16] 0.0, 128
        %v624 = vpop.trf.xlu0
        %v625 = vpop.trf.xlu0
        %v626 = vpop.trf.xlu0
        %v627 = vpop.trf.xlu0
        %v628 = vpop.trf.xlu0
        %v629 = vpop.trf.xlu0
        %v630 = vpop.trf.xlu0
        %v631 = vpop.trf.xlu0
        %v632 = vpop.trf.xlu0
        %v633 = vpop.trf.xlu0
        %v634 = vpop.trf.xlu0
        %v635 = vpop.trf.xlu0
        %v636 = vpop.trf.xlu0
        %v637 = vpop.trf.xlu0
        %v638 = vpop.trf.xlu0
        %v639 = vpop.trf.xlu0
        %v640 = vpack.c.bf16 %v624, %v624
        %v641 = vpack.c.bf16 %v625, %v625
        %v642 = vpack.c.bf16 %v626, %v626
        %v643 = vpack.c.bf16 %v627, %v627
        %644 = vst.msk [vmem:[%s340] sm:$0xf] %vm599, %v640
        %645 = vst.msk [vmem:[%s340 + $0x4] sm:$0xf] %vm599, %v641
        %646 = vst.msk [vmem:[%s340 + $0x8] sm:$0xf] %vm599, %v642
        %647 = vst.msk [vmem:[%s340 + $0xc] sm:$0xf] %vm599, %v643
        %648 = vrot.lane.b32.xlu0 %v443, 120
        %v649 = vpop.permute.xlu0 %648
        %650 = vrot.lane.b32.xlu0 %v443, 112
        %v651 = vpop.permute.xlu0 %650
        %652 = vrot.lane.b32.xlu0 %v443, 104
        %v653 = vpop.permute.xlu0 %652
        %654 = vrot.lane.b32.xlu0 %v443, 64
        %v655 = vpop.permute.xlu0 %654
        %656 = vrot.lane.b32.xlu0 %v649, 64
        %v657 = vpop.permute.xlu0 %656
        %658 = vrot.lane.b32.xlu0 %v651, 64
        %v659 = vpop.permute.xlu0 %658
        %660 = vrot.lane.b32.xlu0 %v653, 64
        %v661 = vpop.permute.xlu0 %660
        %v666 = vcombine.low %v655, %v659
        %v667 = vcombine.high %v655, %v659
        %v669 = vunpack.c.l.s4 1983009808
        %v670 = vunpack.c.0.s8 %v669
        %v671 = vlaneseq
        %v672 = vshrl.u32 %v671, 7
        %v673 = vsub.s32 %v670, %v672
        %v674 = vrot.slane %v666, %v673
        %v676 = vunpack.c.l.s4 1983009808
        %v677 = vunpack.c.0.s8 %v676
        %v678 = vlaneseq
        %v679 = vshrl.u32 %v678, 7
        %v680 = vsub.s32 %v677, %v679
        %v681 = vrot.slane %v667, %v680
        %v682 = vcombine.low %v657, %v661
        %v683 = vcombine.high %v657, %v661
        %v685 = vunpack.c.l.s4 1983009808
        %v686 = vunpack.c.0.s8 %v685
        %v687 = vlaneseq
        %v688 = vshrl.u32 %v687, 7
        %v689 = vsub.s32 %v686, %v688
        %v690 = vrot.slane %v682, %v689
        %v692 = vunpack.c.l.s4 1983009808
        %v693 = vunpack.c.0.s8 %v692
        %v694 = vlaneseq
        %v695 = vshrl.u32 %v694, 7
        %v696 = vsub.s32 %v693, %v695
        %v697 = vrot.slane %v683, %v696
        %v698 = vcombine.low %v674, %v690
        %v699 = vcombine.high %v674, %v690
        %v701 = vunpack.c.l.s4 1934713408
        %v702 = vunpack.c.0.s8 %v701
        %v703 = vlaneseq
        %v704 = vshrl.u32 %v703, 7
        %v705 = vsub.s32 %v702, %v704
        %v706 = vrot.slane %v698, %v705
        %v708 = vunpack.c.l.s4 1934713408
        %v709 = vunpack.c.0.s8 %v708
        %v710 = vlaneseq
        %v711 = vshrl.u32 %v710, 7
        %v712 = vsub.s32 %v709, %v711
        %v713 = vrot.slane %v699, %v712
        %v714 = vcombine.low %v681, %v697
        %v715 = vcombine.high %v681, %v697
        %v717 = vunpack.c.l.s4 1934713408
        %v718 = vunpack.c.0.s8 %v717
        %v719 = vlaneseq
        %v720 = vshrl.u32 %v719, 7
        %v721 = vsub.s32 %v718, %v720
        %v722 = vrot.slane %v714, %v721
        %v724 = vunpack.c.l.s4 1934713408
        %v725 = vunpack.c.0.s8 %v724
        %v726 = vlaneseq
        %v727 = vshrl.u32 %v726, 7
        %v728 = vsub.s32 %v725, %v727
        %v729 = vrot.slane %v715, %v728
        %v730 = vcombine.high %v706, 0.0
        %v731 = vcombine.high %v713, 0.0
        %v732 = vcombine.high %v722, 0.0
        %v733 = vcombine.high %v729, 0.0
        %v734 = vcombine.low %v706, %v713
        %v736 = vunpack.c.l.s4 1983009808
        %v737 = vunpack.c.0.s8 %v736
        %v738 = vlaneseq
        %v739 = vshrl.u32 %v738, 7
        %v740 = vsub.s32 %v737, %v739
        %v741 = vrot.slane %v734, %v740
        %v742 = vcombine.low %v730, %v731
        %v744 = vunpack.c.l.s4 1983009808
        %v745 = vunpack.c.0.s8 %v744
        %v746 = vlaneseq
        %v747 = vshrl.u32 %v746, 7
        %v748 = vsub.s32 %v745, %v747
        %v749 = vrot.slane %v742, %v748
        %v750 = vcombine.low %v722, %v729
        %v752 = vunpack.c.l.s4 1983009808
        %v753 = vunpack.c.0.s8 %v752
        %v754 = vlaneseq
        %v755 = vshrl.u32 %v754, 7
        %v756 = vsub.s32 %v753, %v755
        %v757 = vrot.slane %v750, %v756
        %v758 = vcombine.low %v732, %v733
        %v760 = vunpack.c.l.s4 1983009808
        %v761 = vunpack.c.0.s8 %v760
        %v762 = vlaneseq
        %v763 = vshrl.u32 %v762, 7
        %v764 = vsub.s32 %v761, %v763
        %v765 = vrot.slane %v758, %v764
        %v766 = vcombine.low %v741, %v749
        %v767 = vcombine.high %v741, %v749
        %v769 = vunpack.c.l.s4 1934713408
        %v770 = vunpack.c.0.s8 %v769
        %v771 = vlaneseq
        %v772 = vshrl.u32 %v771, 7
        %v773 = vsub.s32 %v770, %v772
        %v774 = vrot.slane %v766, %v773
        %v776 = vunpack.c.l.s4 1934713408
        %v777 = vunpack.c.0.s8 %v776
        %v778 = vlaneseq
        %v779 = vshrl.u32 %v778, 7
        %v780 = vsub.s32 %v777, %v779
        %v781 = vrot.slane %v767, %v780
        %v782 = vcombine.low %v757, %v765
        %v783 = vcombine.high %v757, %v765
        %v785 = vunpack.c.l.s4 1934713408
        %v786 = vunpack.c.0.s8 %v785
        %v787 = vlaneseq
        %v788 = vshrl.u32 %v787, 7
        %v789 = vsub.s32 %v786, %v788
        %v790 = vrot.slane %v782, %v789
        %v792 = vunpack.c.l.s4 1934713408
        %v793 = vunpack.c.0.s8 %v792
        %v794 = vlaneseq
        %v795 = vshrl.u32 %v794, 7
        %v796 = vsub.s32 %v793, %v795
        %v797 = vrot.slane %v783, %v796
        %v798 = vcombine.low %v774, %v790
        %v799 = vcombine.high %v774, %v790
        %v800 = vcombine.low %v781, %v797
        %v801 = vcombine.high %v781, %v797
        %v802 = vpack.c.bf16 %v798, %v798
        %v803 = vpack.c.bf16 %v799, %v799
        %v804 = vpack.c.bf16 %v800, %v800
        %v805 = vpack.c.bf16 %v801, %v801
        %806 = vst.msk [vmem:[%s347] sm:$0xf] %vm599, %v802
        %807 = vst.msk [vmem:[%s347 + $0x4] sm:$0xf] %vm599, %v803
        %808 = vst.msk [vmem:[%s347 + $0x8] sm:$0xf] %vm599, %v804
        %809 = vst.msk [vmem:[%s347 + $0xc] sm:$0xf] %vm599, %v805
        %s810 = sand.u32 %s163, 1
        %s811 = scalar_lea.sflag [#allocation4], %s810
        %s812 = sand.u32 %s163, 1
        %s813 = smul.addr %s812, 16
        %s814 = scalar_lea.vmem [#allocation7], %s813
        %s815 = sand.u32 %s29, 1
        %s816 = scalar_lea.sflag [#allocation9], %s815
        %s817 = sand.u32 %s191, 1
        %s818 = smul.addr %s817, 16
        %s819 = scalar_lea.vmem [#allocation8], %s818
        %s820 = sand.u32 %s29, 1
        %s821 = scalar_lea.sflag [#allocation9], %s820
        %s822 = sand.u32 %s219, 1
        %s823 = smul.addr %s822, 16
        %s824 = scalar_lea.vmem [#allocation10], %s823
        // Predicated region
        $region49: #{tpu_custom_call.1} parent=39 // pred_check
          %p825 = pneg %p173
        $region50: #{tpu_custom_call.1} parent=39 // pred_check_branch
          %827 = sbr.rel (%p825) target = $region52
        $region51: #{tpu_custom_call.1} parent=39 // pred_region
          %s829 = ssub.s32 256, 256
          %830 = vsyncadd %s811, %s829
          %s831 = smul.addr %s33, 4
          %s832 = sadd.s32 %s34, %s831
          %s833 = smul.addr %s832, 64
          %s834 = scalar_lea.hbm %s5, %s833
          %s835 = sshll.u32 %s814, 4
          %s836 = int_to_ptr.vmem [resolvable:$true] %s835
          %841 = dma.vmem_to_hbm [thread:$0]  %s836, 256, %s834, %s811, 64, 64, 4
        $region52: #{tpu_custom_call.1} parent=39 // pred_fallthru
          _
        // Predicated region
        $region53: #{tpu_custom_call.1} parent=39 // pred_check
          %p842 = pneg %p201
        $region54: #{tpu_custom_call.1} parent=39 // pred_check_branch
          %844 = sbr.rel (%p842) target = $region56
        $region55: #{tpu_custom_call.1} parent=39 // pred_region
          %s846 = ssub.s32 256, 256
          %847 = vsyncadd %s816, %s846
          %s848 = smul.addr %s33, 4
          %s849 = sadd.s32 %s34, %s848
          %s850 = smul.addr %s849, 64
          %s851 = scalar_lea.hbm %s6, %s850
          %s852 = sshll.u32 %s819, 4
          %s853 = int_to_ptr.vmem [resolvable:$true] %s852
          %858 = dma.vmem_to_hbm [thread:$0]  %s853, 256, %s851, %s816, 64, 64, 4
        $region56: #{tpu_custom_call.1} parent=39 // pred_fallthru
          _
        // Predicated region
        $region57: #{tpu_custom_call.1} parent=39 // pred_check
          %p859 = pneg %p229
        $region58: #{tpu_custom_call.1} parent=39 // pred_check_branch
          %861 = sbr.rel (%p859) target = $region60
        $region59: #{tpu_custom_call.1} parent=39 // pred_region
          %s863 = ssub.s32 256, 256
          %864 = vsyncadd %s821, %s863
          %s865 = smul.addr %s33, 4
          %s866 = sadd.s32 %s34, %s865
          %s867 = smul.addr %s866, 64
          %s868 = scalar_lea.hbm %s7, %s867
          %s869 = sshll.u32 %s824, 4
          %s870 = int_to_ptr.vmem [resolvable:$true] %s869
          %875 = dma.vmem_to_hbm [thread:$0]  %s870, 256, %s868, %s821, 64, 64, 4
        $region60: #{tpu_custom_call.1} parent=39 // pred_fallthru
          _
      $region40: #{tpu_custom_call.1} parent=5 // pred_fallthru
        _
      %p876 = scmp.le.s32.totalorder 2, %s24
      // Predicated region
      $region61: #{tpu_custom_call.1} parent=5 // pred_check
        %p877 = pneg %p876
      $region62: #{tpu_custom_call.1} parent=5 // pred_check_branch
        %879 = sbr.rel (%p877) target = $region64
      $region63: #{tpu_custom_call.1} parent=5 // pred_region
        %s880 = ssub.s32 %s24, 2
        // Predicated region
        $region65: #{tpu_custom_call.1} parent=63 // pred_check
          %p881 = pneg %p179
        $region66: #{tpu_custom_call.1} parent=63 // pred_check_branch
          %883 = sbr.rel (%p881) target = $region68
        $region67: #{tpu_custom_call.1} parent=63 // pred_region
          %s884 = sand.u32 %s164, 1
          %s885 = scalar_lea.sflag [#allocation4], %s884
          %s886 = sand.u32 %s164, 1
          %s887 = smul.addr %s886, 16
          %s888 = scalar_lea.vmem [#allocation7], %s887
          %889 = dma.done %s885, 256
        $region68: #{tpu_custom_call.1} parent=63 // pred_fallthru
          _
        // Predicated region
        $region69: #{tpu_custom_call.1} parent=63 // pred_check
          %p890 = pneg %p207
        $region70: #{tpu_custom_call.1} parent=63 // pred_check_branch
          %892 = sbr.rel (%p890) target = $region72
        $region71: #{tpu_custom_call.1} parent=63 // pred_region
          %s893 = sand.u32 %s30, 1
          %s894 = scalar_lea.sflag [#allocation9], %s893
          %s895 = sand.u32 %s192, 1
          %s896 = smul.addr %s895, 16
          %s897 = scalar_lea.vmem [#allocation8], %s896
          %898 = dma.done %s894, 256
        $region72: #{tpu_custom_call.1} parent=63 // pred_fallthru
          _
        // Predicated region
        $region73: #{tpu_custom_call.1} parent=63 // pred_check
          %p899 = pneg %p235
        $region74: #{tpu_custom_call.1} parent=63 // pred_check_branch
          %901 = sbr.rel (%p899) target = $region76
        $region75: #{tpu_custom_call.1} parent=63 // pred_region
          %s902 = sand.u32 %s30, 1
          %s903 = scalar_lea.sflag [#allocation9], %s902
          %s904 = sand.u32 %s220, 1
          %s905 = smul.addr %s904, 16
          %s906 = scalar_lea.vmem [#allocation10], %s905
          %907 = dma.done %s903, 256
        $region76: #{tpu_custom_call.1} parent=63 // pred_fallthru
          _
      $region64: #{tpu_custom_call.1} parent=5 // pred_fallthru
        _
    $region6: #{tpu_custom_call.1} parent=1 // loop_footer
      %s28 = sadd.s32 1, %s24
    $region7: #{tpu_custom_call.1} parent=1 // loop_footer_branch
      %23 = sbr.rel target = $region3
    $region8: #{tpu_custom_call.1} parent=1 // loop_exit
      _
    %908 = vsyncpa [#allocation3], 1
    %s909 = scalar_lea.sflag [#allocation3], 1
    %910 = vsyncpa %s909, 1
    %911 = vsyncpa [#allocation6], 1
    %912 = vsyncpa [#allocation4], 1
    %s913 = scalar_lea.sflag [#allocation4], 1
    %914 = vsyncpa %s913, 1
    %915 = vsyncpa [#allocation9], 1
    %s916 = scalar_lea.sflag [#allocation9], 1
    %917 = vsyncpa %s916, 1

</llo_original>
